<compile_context>
chip_gen: v7x
topology: tpu7x:2x2x1
jax: 0.10.0
libtpu: 0.0.40
codegen_flags: <defaults>
</compile_context>

<pallas_src>
import functools

import jax
import jax.numpy as jnp
import numpy as np
from jax.experimental import pallas as pl
from jax.experimental.pallas import tpu as pltpu

C = 3             # image / latent channels (module hardcodes the 32x32 / C view)
D = 64            # hidden channels of the first 1x1 conv
H = W = 32
HW = H * W
NTAP = 2 * C - 1          # taps d = -(C-1) .. (C-1)
NPLANES = 4 * C - 3       # 5 in-row planes + 2 cross-up planes + 2 cross-down planes


# ------------------------------------------------------------- plane slots ---
def _slot_A(d):           # in-row plane for tap d, d in [-(C-1), C-1]
    return d + (C - 1)


def _slot_G(d):           # cross-row (row c+1) plane for tap d, d in [1, C-1]
    return (2 * C - 2) + d


def _slot_H(d):           # cross-row (row c-1) plane for tap d, d in [-(C-1), -1]
    return (3 * C - 3) + (-d)


# ----------------------------------------------------------------- kernel ---
def _fused_kernel(x_ref, w1_ref, b1_ref, w2_ref, b2_ref,
                  w3_ref, w3up_ref, w3dn_ref, b3_ref, coef_ref, o_ref):
    # x_ref   : (C, wb)   channel-major input tile, wb = tb*HW lanes (tb whole images)
    # w1 (D,C) b1 (D,1)   w2 (C,D) b2 (C,1)   w3/w3up/w3dn (3,C)  b3 (3,1)
    # coef_ref: (C, NPLANES*wb) lane-concatenated, lane-tiled coefficient planes
    # o_ref   : (3, wb)   lane-dense output tile
    wb = x_ref.shape[-1]

    # ---- stage 1: the two 1x1 convs as lane-dense channel matmuls (MXU) ----
    x = x_ref[...]                                                       # (C, wb)
    h = jnp.dot(w1_ref[...], x, preferred_element_type=jnp.float32) + b1_ref[...]
    h = jnp.maximum(h, 0.0)                                              # ReLU, (D, wb)
    y = jnp.dot(w2_ref[...], h, preferred_element_type=jnp.float32) + b2_ref[...]

    def plane(k):                 # lane-aligned static window -> (C, wb) coefficient plane
        lo = k * wb
        return coef_ref[:, lo:lo + wb]

    # ---- similarity stage: (raw view -> @S -> raw view-back) as lane-rolled taps ----
    # In-row taps accumulate into z_in; cross-row taps accumulate into u_pos / u_neg and
    # are mapped back to the right channel row by the shifted output weights w3up / w3dn.
    z_in = plane(_slot_A(0)) * y
    u_pos = None
    u_neg = None
    for d in range(1, C):
        # in-row taps +d / -d: same channel row, lane shifted by +-d (XLU lane roll)
        z_in = z_in + plane(_slot_A(d)) * pltpu.roll(y, shift=(-d) % wb, axis=1)
        z_in = z_in + plane(_slot_A(-d)) * pltpu.roll(y, shift=d % wb, axis=1)
        # cross-row taps: only the <= d wrapped boundary lanes per image row are nonzero
        # in these planes; the row shift is folded into w3up / w3dn, so only a lane roll
        # is needed (no sublane movement, no eye-matmuls, batch boundaries are masked).
        tp = plane(_slot_G(d)) * pltpu.roll(y, shift=(HW - d) % wb, axis=1)
        u_pos = tp if u_pos is None else u_pos + tp
        tn = plane(_slot_H(-d)) * pltpu.roll(y, shift=(d - HW) % wb, axis=1)
        u_neg = tn if u_neg is None else u_neg + tn

    # ---- output 1x1 conv (C -> 3); cross-row taps enter via the shifted weights ----
    out = jnp.dot(w3_ref[...], z_in, preferred_element_type=jnp.float32) + b3_ref[...]
    out = out + jnp.dot(w3up_ref[...], u_pos, preferred_element_type=jnp.float32)
    out = out + jnp.dot(w3dn_ref[...], u_neg, preferred_element_type=jnp.float32)
    o_ref[...] = out.astype(o_ref.dtype)


# ----------------------------------------------- similarity coefficient prep ---
def build_similarity_planes(s, tb):
    """Fold (raw view -> @S -> raw view-back) into per-tap coefficient planes.

    For channel-major flat index i = c*HW + l, with m0 = i % C:
        z_flat[i] = sum_d S[m0 + d, m0] * y_flat[i + d],   valid when 0 <= m0 + d < C.
    Tap d reads lane l+d of the same channel row (plane A) when 0 <= l+d < HW, otherwise
    row c+1 (d>0) / c-1 (d<0) at lane (l+d) mod HW.  The cross-row planes are pre-shifted
    one row (G/H) so the row shift lands in the w3up/w3dn output weights, not in-kernel.
    Planes are tiled to the tb-image block width and concatenated lane-wise so the kernel
    slices them with lane-aligned static windows.  Runs once per parameter set (hoisted
    out of the jitted forward).
    """
    s = np.asarray(s, dtype=np.float32)
    i = np.arange(C * HW)
    m0 = i % C
    l = i % HW
    planes = [None] * NPLANES
    for d in range(-(C - 1), C):
        j = m0 + d
        valid = (j >= 0) & (j < C)
        coef = np.where(valid, s[np.clip(j, 0, C - 1), m0], 0.0).astype(np.float32)
        in_row = (l + d >= 0) & (l + d < HW)
        planes[_slot_A(d)] = np.where(in_row, coef, 0.0).astype(np.float32).reshape(C, HW)
        cross = np.where(in_row, 0.0, coef).astype(np.float32).reshape(C, HW)
        if d > 0:
            # wrap-safety: a valid cross-row tap never references a row >= C, so the
            # top channel row must carry exactly-zero cross coefficients.
            assert np.all(cross[C - 1] == 0.0)
            g = np.zeros((C, HW), np.float32)
            g[1:] = cross[:-1]                       # G_d[c'] = cross_d[c'-1]
            planes[_slot_G(d)] = g
        elif d < 0:
            assert np.all(cross[0] == 0.0)
            hp = np.zeros((C, HW), np.float32)
            hp[:-1] = cross[1:]                      # H_d[c'] = cross_d[c'+1]
            planes[_slot_H(d)] = hp
    tiled = [np.tile(p, (1, tb)) for p in planes]
    return jnp.asarray(np.concatenate(tiled, axis=1), dtype=jnp.float32)  # (C, NPLANES*tb*HW)


def prepare_params(params, tb):
    """Parameter-only preprocessing (done once, outside the jitted per-call path)."""
    w1, b1, w2, b2, s, w3, b3 = params
    coef = build_similarity_planes(s, tb)
    zero_col = jnp.zeros((3, 1), jnp.float32)
    w3up = jnp.concatenate([zero_col, w3[:, :C - 1]], axis=1)   # w3up[:, c'] = w3[:, c'-1]
    w3dn = jnp.concatenate([w3[:, 1:], zero_col], axis=1)       # w3dn[:, c'] = w3[:, c'+1]
    return (w1, b1.reshape(D, 1), w2, b2.reshape(C, 1),
            w3, w3up, w3dn, b3.reshape(3, 1), coef)


# ---------------------------------------------------------------- wrapper ---
@functools.partial(jax.jit, static_argnames=("tb",))
def _forward(x, prepared, *, tb):
    """x: (B, C, 32, 32) f32 -> (B, 32, 3, 32) f32 (matches permute(0, 2, 1, 3))."""
    w1, b1, w2, b2, w3, w3up, w3dn, b3, coef = prepared
    batch = x.shape[0]
    nblk = pl.cdiv(batch, tb)
    bpad = nblk * tb
    wb = tb * HW

    # channel-major with batch folded into the lane dimension: (C, B*HW)
    x_cm = x.reshape(batch, C, HW).transpose(1, 0, 2).reshape(C, batch * HW)
    if bpad != batch:
        x_cm = jnp.pad(x_cm, ((0, 0), (0, (bpad - batch) * HW)))

    flops = 2 * bpad * HW * (D * C + C * D + 9 * C) + bpad * HW * (D + 2 * NPLANES * C)
    bytes_accessed = 4 * (C * bpad * HW + 3 * bpad * HW + C * NPLANES * wb
                          + 2 * D * C + D + C + 9 * C + 3)

    out_flat = pl.pallas_call(
        _fused_kernel,
        grid=(nblk,),
        in_specs=[
            pl.BlockSpec((C, wb), lambda i: (0, i)),             # x tile (tb images)
            pl.BlockSpec((D, C), lambda i: (0, 0)),              # w1
            pl.BlockSpec((D, 1), lambda i: (0, 0)),              # b1
            pl.BlockSpec((C, D), lambda i: (0, 0)),              # w2
            pl.BlockSpec((C, 1), lambda i: (0, 0)),              # b2
            pl.BlockSpec((3, C), lambda i: (0, 0)),              # w3
            pl.BlockSpec((3, C), lambda i: (0, 0)),              # w3up
            pl.BlockSpec((3, C), lambda i: (0, 0)),              # w3dn
            pl.BlockSpec((3, 1), lambda i: (0, 0)),              # b3
            pl.BlockSpec((C, NPLANES * wb), lambda i: (0, 0)),   # coefficient planes
        ],
        out_specs=pl.BlockSpec((3, wb), lambda i: (0, i)),       # lane-dense output tile
        out_shape=jax.ShapeDtypeStruct((3, bpad * HW), jnp.float32),
        compiler_params=pltpu.CompilerParams(
            dimension_semantics=("parallel",),
            vmem_limit_bytes=32 * 1024 * 1024,
        ),
        cost_estimate=pl.CostEstimate(
            flops=flops, transcendentals=0, bytes_accessed=bytes_accessed),
    )(x_cm, w1, b1, w2, b2, w3, w3up, w3dn, b3, coef)

    out = out_flat[:, :batch * HW].reshape(3, batch, H, W)
    # (3, B, H, W) -> (B, H, 3, W)  == PyTorch's output.permute(0, 2, 1, 3)
    return jnp.transpose(out, (1, 2, 0, 3))


def make_inverse_imaging_forward(params, tb):
    """Returns forward(x) with all parameter-only prep (planes, shifted w3) hoisted."""
    prepared = prepare_params(params, tb)

    def forward(x):
        return _forward(x, prepared, tb=tb)

    return forward


# ------------------------------------------------------- pure-JAX reference -
def reference_forward(x, params):
    w1, b1, w2, b2, s, w3, b3 = params
    batch = x.shape[0]
    hi = jax.lax.Precision.HIGHEST
    h = jnp.einsum('dc,bchw->bdhw', w1, x, precision=hi) + b1[None, :, None, None]
    h = jnp.maximum(h, 0.0)
    y = jnp.einsum('cd,bdhw->bchw', w2, h, precision=hi) + b2[None, :, None, None]
    v = y.reshape(batch, HW, C)
    m = jnp.einsum('bpc,ck->bpk', v, s, precision=hi)
    z = m.reshape(batch, C, H, W)
    o = jnp.einsum('oc,bchw->bohw', w3, z, precision=hi) + b3[None, :, None, None]
    return jnp.transpose(o, (0, 2, 1, 3))


# ------------------------------------------------------------------- main ---
if __name__ == "__main__":
    key = jax.random.PRNGKey(0)
    kx, k1, k2, k3, k4, k5, k6, k7 = jax.random.split(key, 8)

    B = 2
    x = jax.random.normal(kx, (B, C, H, W), dtype=jnp.float32)

    # Deterministic synthetic parameters (shapes from nn.Conv2d 1x1 / nn.Parameter).
    w1 = jax.random.normal(k1, (D, C), dtype=jnp.float32) * 0.1   # conv_layer.weight (D,C,1,1)
    b1 = jax.random.normal(k2, (D,), dtype=jnp.float32) * 0.1     # conv_layer.bias
    w2 = jax.random.normal(k3, (C, D), dtype=jnp.float32) * 0.1   # fc_layer.weight  (C,D,1,1)
    b2 = jax.random.normal(k4, (C,), dtype=jnp.float32) * 0.1     # fc_layer.bias
    s = jax.random.normal(k5, (C, C), dtype=jnp.float32)          # similarity_matrix
    w3 = jax.random.normal(k6, (3, C), dtype=jnp.float32) * 0.1   # output_layer.weight (3,C,1,1)
    b3 = jax.random.normal(k7, (3,), dtype=jnp.float32) * 0.1     # output_layer.bias
    params = (w1, b1, w2, b2, s, w3, b3)

    # tb images per grid step (lane tile = tb*1024).  Small tb keeps both v7x TensorCores
    # busy even at tiny batch; larger tb amortises per-step overhead for big batches while
    # the per-step VMEM footprint (~1.3 MiB * tb) stays well under every generation's limit.
    tb = max(1, min(8, B // 2))
    forward = make_inverse_imaging_forward(params, tb)

    out = jax.block_until_ready(forward(x))
    ref = jax.block_until_ready(reference_forward(x, params))

    assert out.shape == (B, H, 3, W), out.shape
    assert jnp.allclose(out, ref, rtol=1e-3, atol=1e-3), "mismatch vs reference"
    print("KERNEL_OK")
</pallas_src>

<mosaic_0001>
module attributes {stable_mosaic.version = 11 : i64} {
  func.func @_fused_kernel(%arg0: i32, %arg1: memref<3x1024xf32, #tpu.memory_space<vmem>>, %arg2: memref<64x3xf32, #tpu.memory_space<vmem>>, %arg3: memref<64x1xf32, #tpu.memory_space<vmem>>, %arg4: memref<3x64xf32, #tpu.memory_space<vmem>>, %arg5: memref<3x1xf32, #tpu.memory_space<vmem>>, %arg6: memref<3x3xf32, #tpu.memory_space<vmem>>, %arg7: memref<3x3xf32, #tpu.memory_space<vmem>>, %arg8: memref<3x3xf32, #tpu.memory_space<vmem>>, %arg9: memref<3x1xf32, #tpu.memory_space<vmem>>, %arg10: memref<3x9216xf32, #tpu.memory_space<vmem>>, %arg11: memref<3x1024xf32, #tpu.memory_space<vmem>>) attributes {dimension_semantics = [#tpu.dimension_semantics<parallel>], iteration_bounds = array<i64: 2>, scalar_prefetch = 0 : i64, scratch_operands = 0 : i64, tpu.core_type = #tpu.core_type<tc>, window_params = [{transform_indices = @transform_0, window_bounds = array<i64: 3, 1024>}, {pipeline_mode = #tpu.pipeline_mode<synchronous>, transform_indices = @transform_1, window_bounds = array<i64: 64, 3>}, {pipeline_mode = #tpu.pipeline_mode<synchronous>, transform_indices = @transform_2, window_bounds = array<i64: 64, 1>}, {pipeline_mode = #tpu.pipeline_mode<synchronous>, transform_indices = @transform_3, window_bounds = array<i64: 3, 64>}, {pipeline_mode = #tpu.pipeline_mode<synchronous>, transform_indices = @transform_4, window_bounds = array<i64: 3, 1>}, {pipeline_mode = #tpu.pipeline_mode<synchronous>, transform_indices = @transform_5, window_bounds = array<i64: 3, 3>}, {pipeline_mode = #tpu.pipeline_mode<synchronous>, transform_indices = @transform_6, window_bounds = array<i64: 3, 3>}, {pipeline_mode = #tpu.pipeline_mode<synchronous>, transform_indices = @transform_7, window_bounds = array<i64: 3, 3>}, {pipeline_mode = #tpu.pipeline_mode<synchronous>, transform_indices = @transform_8, window_bounds = array<i64: 3, 1>}, {pipeline_mode = #tpu.pipeline_mode<synchronous>, transform_indices = @transform_9, window_bounds = array<i64: 3, 9216>}, {transform_indices = @transform_10, window_bounds = array<i64: 3, 1024>}]} {
    %c0 = arith.constant 0 : index
    %c0_0 = arith.constant 0 : index
    %0 = vector.load %arg1[%c0, %c0_0] : memref<3x1024xf32, #tpu.memory_space<vmem>>, vector<3x1024xf32>
    %c0_1 = arith.constant 0 : index
    %c0_2 = arith.constant 0 : index
    %1 = vector.load %arg2[%c0_1, %c0_2] : memref<64x3xf32, #tpu.memory_space<vmem>>, vector<64x3xf32>
    %cst = arith.constant dense<0.000000e+00> : vector<64x1024xf32>
    %2 = tpu.matmul %1, %0, %cst {dimension_numbers = #tpu.dot_dimension_numbers<[1], [0], [0], [1], [0, 0, 1, 1], [], []>} : vector<64x3xf32>, vector<3x1024xf32>, vector<64x1024xf32> -> vector<64x1024xf32>
    %c0_3 = arith.constant 0 : index
    %c0_4 = arith.constant 0 : index
    %3 = vector.load %arg3[%c0_3, %c0_4] : memref<64x1xf32, #tpu.memory_space<vmem>>, vector<64x1xf32>
    %4 = vector.broadcast %3 : vector<64x1xf32> to vector<64x1024xf32>
    %5 = arith.addf %2, %4 : vector<64x1024xf32>
    %cst_5 = arith.constant 0.000000e+00 : f32
    %6 = vector.broadcast %cst_5 : f32 to vector<64x1024xf32>
    %7 = arith.maximumf %5, %6 : vector<64x1024xf32>
    %c0_6 = arith.constant 0 : index
    %c0_7 = arith.constant 0 : index
    %8 = vector.load %arg4[%c0_6, %c0_7] : memref<3x64xf32, #tpu.memory_space<vmem>>, vector<3x64xf32>
    %cst_8 = arith.constant dense<0.000000e+00> : vector<3x1024xf32>
    %9 = tpu.matmul %8, %7, %cst_8 {dimension_numbers = #tpu.dot_dimension_numbers<[1], [0], [0], [1], [0, 0, 1, 1], [], []>} : vector<3x64xf32>, vector<64x1024xf32>, vector<3x1024xf32> -> vector<3x1024xf32>
    %c0_9 = arith.constant 0 : index
    %c0_10 = arith.constant 0 : index
    %10 = vector.load %arg5[%c0_9, %c0_10] : memref<3x1xf32, #tpu.memory_space<vmem>>, vector<3x1xf32>
    %11 = vector.broadcast %10 : vector<3x1xf32> to vector<3x1024xf32>
    %12 = arith.addf %9, %11 : vector<3x1024xf32>
    %c0_11 = arith.constant 0 : index
    %c2048 = arith.constant 2048 : index
    %13 = vector.load %arg10[%c0_11, %c2048] : memref<3x9216xf32, #tpu.memory_space<vmem>>, vector<3x1024xf32>
    %14 = arith.mulf %13, %12 : vector<3x1024xf32>
    %c0_12 = arith.constant 0 : index
    %c3072 = arith.constant 3072 : index
    %15 = vector.load %arg10[%c0_12, %c3072] : memref<3x9216xf32, #tpu.memory_space<vmem>>, vector<3x1024xf32>
    %c1023_i32 = arith.constant 1023 : i32
    %16 = tpu.dynamic_rotate %12 by %c1023_i32 dim 1 : vector<3x1024xf32>, i32 -> vector<3x1024xf32>
    %17 = arith.mulf %15, %16 : vector<3x1024xf32>
    %18 = arith.addf %14, %17 : vector<3x1024xf32>
    %c0_13 = arith.constant 0 : index
    %c1024 = arith.constant 1024 : index
    %19 = vector.load %arg10[%c0_13, %c1024] : memref<3x9216xf32, #tpu.memory_space<vmem>>, vector<3x1024xf32>
    %c1_i32 = arith.constant 1 : i32
    %20 = tpu.dynamic_rotate %12 by %c1_i32 dim 1 : vector<3x1024xf32>, i32 -> vector<3x1024xf32>
    %21 = arith.mulf %19, %20 : vector<3x1024xf32>
    %22 = arith.addf %18, %21 : vector<3x1024xf32>
    %c0_14 = arith.constant 0 : index
    %c5120 = arith.constant 5120 : index
    %23 = vector.load %arg10[%c0_14, %c5120] : memref<3x9216xf32, #tpu.memory_space<vmem>>, vector<3x1024xf32>
    %c1023_i32_15 = arith.constant 1023 : i32
    %24 = tpu.dynamic_rotate %12 by %c1023_i32_15 dim 1 : vector<3x1024xf32>, i32 -> vector<3x1024xf32>
    %25 = arith.mulf %23, %24 : vector<3x1024xf32>
    %c0_16 = arith.constant 0 : index
    %c7168 = arith.constant 7168 : index
    %26 = vector.load %arg10[%c0_16, %c7168] : memref<3x9216xf32, #tpu.memory_space<vmem>>, vector<3x1024xf32>
    %c1_i32_17 = arith.constant 1 : i32
    %27 = tpu.dynamic_rotate %12 by %c1_i32_17 dim 1 : vector<3x1024xf32>, i32 -> vector<3x1024xf32>
    %28 = arith.mulf %26, %27 : vector<3x1024xf32>
    %c0_18 = arith.constant 0 : index
    %c4096 = arith.constant 4096 : index
    %29 = vector.load %arg10[%c0_18, %c4096] : memref<3x9216xf32, #tpu.memory_space<vmem>>, vector<3x1024xf32>
    %c1022_i32 = arith.constant 1022 : i32
    %30 = tpu.dynamic_rotate %12 by %c1022_i32 dim 1 : vector<3x1024xf32>, i32 -> vector<3x1024xf32>
    %31 = arith.mulf %29, %30 : vector<3x1024xf32>
    %32 = arith.addf %22, %31 : vector<3x1024xf32>
    %c0_19 = arith.constant 0 : index
    %c0_20 = arith.constant 0 : index
    %33 = vector.load %arg10[%c0_19, %c0_20] : memref<3x9216xf32, #tpu.memory_space<vmem>>, vector<3x1024xf32>
    %c2_i32 = arith.constant 2 : i32
    %34 = tpu.dynamic_rotate %12 by %c2_i32 dim 1 : vector<3x1024xf32>, i32 -> vector<3x1024xf32>
    %35 = arith.mulf %33, %34 : vector<3x1024xf32>
    %36 = arith.addf %32, %35 : vector<3x1024xf32>
    %c0_21 = arith.constant 0 : index
    %c6144 = arith.constant 6144 : index
    %37 = vector.load %arg10[%c0_21, %c6144] : memref<3x9216xf32, #tpu.memory_space<vmem>>, vector<3x1024xf32>
    %c1022_i32_22 = arith.constant 1022 : i32
    %38 = tpu.dynamic_rotate %12 by %c1022_i32_22 dim 1 : vector<3x1024xf32>, i32 -> vector<3x1024xf32>
    %39 = arith.mulf %37, %38 : vector<3x1024xf32>
    %40 = arith.addf %25, %39 : vector<3x1024xf32>
    %c0_23 = arith.constant 0 : index
    %c8192 = arith.constant 8192 : index
    %41 = vector.load %arg10[%c0_23, %c8192] : memref<3x9216xf32, #tpu.memory_space<vmem>>, vector<3x1024xf32>
    %c2_i32_24 = arith.constant 2 : i32
    %42 = tpu.dynamic_rotate %12 by %c2_i32_24 dim 1 : vector<3x1024xf32>, i32 -> vector<3x1024xf32>
    %43 = arith.mulf %41, %42 : vector<3x1024xf32>
    %44 = arith.addf %28, %43 : vector<3x1024xf32>
    %c0_25 = arith.constant 0 : index
    %c0_26 = arith.constant 0 : index
    %45 = vector.load %arg6[%c0_25, %c0_26] : memref<3x3xf32, #tpu.memory_space<vmem>>, vector<3x3xf32>
    %cst_27 = arith.constant dense<0.000000e+00> : vector<3x1024xf32>
    %46 = tpu.matmul %45, %36, %cst_27 {dimension_numbers = #tpu.dot_dimension_numbers<[1], [0], [0], [1], [0, 0, 1, 1], [], []>} : vector<3x3xf32>, vector<3x1024xf32>, vector<3x1024xf32> -> vector<3x1024xf32>
    %c0_28 = arith.constant 0 : index
    %c0_29 = arith.constant 0 : index
    %47 = vector.load %arg9[%c0_28, %c0_29] : memref<3x1xf32, #tpu.memory_space<vmem>>, vector<3x1xf32>
    %48 = vector.broadcast %47 : vector<3x1xf32> to vector<3x1024xf32>
    %49 = arith.addf %46, %48 : vector<3x1024xf32>
    %c0_30 = arith.constant 0 : index
    %c0_31 = arith.constant 0 : index
    %50 = vector.load %arg7[%c0_30, %c0_31] : memref<3x3xf32, #tpu.memory_space<vmem>>, vector<3x3xf32>
    %cst_32 = arith.constant dense<0.000000e+00> : vector<3x1024xf32>
    %51 = tpu.matmul %50, %40, %cst_32 {dimension_numbers = #tpu.dot_dimension_numbers<[1], [0], [0], [1], [0, 0, 1, 1], [], []>} : vector<3x3xf32>, vector<3x1024xf32>, vector<3x1024xf32> -> vector<3x1024xf32>
    %52 = arith.addf %49, %51 : vector<3x1024xf32>
    %c0_33 = arith.constant 0 : index
    %c0_34 = arith.constant 0 : index
    %53 = vector.load %arg8[%c0_33, %c0_34] : memref<3x3xf32, #tpu.memory_space<vmem>>, vector<3x3xf32>
    %cst_35 = arith.constant dense<0.000000e+00> : vector<3x1024xf32>
    %54 = tpu.matmul %53, %44, %cst_35 {dimension_numbers = #tpu.dot_dimension_numbers<[1], [0], [0], [1], [0, 0, 1, 1], [], []>} : vector<3x3xf32>, vector<3x1024xf32>, vector<3x1024xf32> -> vector<3x1024xf32>
    %55 = arith.addf %52, %54 : vector<3x1024xf32>
    %c0_36 = arith.constant 0 : index
    %c0_37 = arith.constant 0 : index
    %56 = vector.load %arg11[%c0_36, %c0_37] : memref<3x1024xf32, #tpu.memory_space<vmem>>, vector<3x1024xf32>
    tpu.vector_store %arg11[%c0_36, %c0_37], %55 {strides = array<i32>} : memref<3x1024xf32, #tpu.memory_space<vmem>>, vector<3x1024xf32>,
    return
  }
  func.func @transform_0(%arg0: i32) -> (i32, i32) {
    %c0_i32 = arith.constant 0 : i32
    %c0_i32_0 = arith.constant 0 : i32
    return %c0_i32, %arg0 : i32, i32
  }
  func.func @transform_1(%arg0: i32) -> (i32, i32) {
    %c0_i32 = arith.constant 0 : i32
    %c0_i32_0 = arith.constant 0 : i32
    %c0_i32_1 = arith.constant 0 : i32
    return %c0_i32, %c0_i32_0 : i32, i32
  }
  func.func @transform_2(%arg0: i32) -> (i32, i32) {
    %c0_i32 = arith.constant 0 : i32
    %c0_i32_0 = arith.constant 0 : i32
    %c0_i32_1 = arith.constant 0 : i32
    return %c0_i32, %c0_i32_0 : i32, i32
  }
  func.func @transform_3(%arg0: i32) -> (i32, i32) {
    %c0_i32 = arith.constant 0 : i32
    %c0_i32_0 = arith.constant 0 : i32
    %c0_i32_1 = arith.constant 0 : i32
    return %c0_i32, %c0_i32_0 : i32, i32
  }
  func.func @transform_4(%arg0: i32) -> (i32, i32) {
    %c0_i32 = arith.constant 0 : i32
    %c0_i32_0 = arith.constant 0 : i32
    %c0_i32_1 = arith.constant 0 : i32
    return %c0_i32, %c0_i32_0 : i32, i32
  }
  func.func @transform_5(%arg0: i32) -> (i32, i32) {
    %c0_i32 = arith.constant 0 : i32
    %c0_i32_0 = arith.constant 0 : i32
    %c0_i32_1 = arith.constant 0 : i32
    return %c0_i32, %c0_i32_0 : i32, i32
  }
  func.func @transform_6(%arg0: i32) -> (i32, i32) {
    %c0_i32 = arith.constant 0 : i32
    %c0_i32_0 = arith.constant 0 : i32
    %c0_i32_1 = arith.constant 0 : i32
    return %c0_i32, %c0_i32_0 : i32, i32
  }
  func.func @transform_7(%arg0: i32) -> (i32, i32) {
    %c0_i32 = arith.constant 0 : i32
    %c0_i32_0 = arith.constant 0 : i32
    %c0_i32_1 = arith.constant 0 : i32
    return %c0_i32, %c0_i32_0 : i32, i32
  }
  func.func @transform_8(%arg0: i32) -> (i32, i32) {
    %c0_i32 = arith.constant 0 : i32
    %c0_i32_0 = arith.constant 0 : i32
    %c0_i32_1 = arith.constant 0 : i32
    return %c0_i32, %c0_i32_0 : i32, i32
  }
  func.func @transform_9(%arg0: i32) -> (i32, i32) {
    %c0_i32 = arith.constant 0 : i32
    %c0_i32_0 = arith.constant 0 : i32
    %c0_i32_1 = arith.constant 0 : i32
    return %c0_i32, %c0_i32_0 : i32, i32
  }
  func.func @transform_10(%arg0: i32) -> (i32, i32) {
    %c0_i32 = arith.constant 0 : i32
    %c0_i32_0 = arith.constant 0 : i32
    return %c0_i32, %arg0 : i32, i32
  }
}

</mosaic_0001>

<llo_original>
// kernel: _forward.1
$region0: #{_forward.1}
  #allocation0 [shape = 'u32[]', space=smem, size = 0x4, offset = 0x4, fixed_abs, tag = 'smem constant byte address 0x4 - core index']
  #allocation1 [shape = 'u32[144,128]{1,0:T(1,128)}', space=vmem, size = 0x12000, scoped, tag = 'internal scratch']
  %s0 = inlined_call_operand.vmem [shape: f32[3,2048], index: 0, kind: input, shape index: {}]
  %s1 = inlined_call_operand.vmem [shape: f32[64,3], index: 1, kind: input, shape index: {}]
  %s2 = inlined_call_operand.vmem [shape: f32[64,1], index: 2, kind: input, shape index: {}]
  %s3 = inlined_call_operand.vmem [shape: f32[3,64], index: 3, kind: input, shape index: {}]
  %s4 = inlined_call_operand.vmem [shape: f32[3,1], index: 4, kind: input, shape index: {}]
  %s5 = inlined_call_operand.vmem [shape: f32[3,3], index: 5, kind: input, shape index: {}]
  %s6 = inlined_call_operand.vmem [shape: f32[3,3], index: 6, kind: input, shape index: {}]
  %s7 = inlined_call_operand.vmem [shape: f32[3,3], index: 7, kind: input, shape index: {}]
  %s8 = inlined_call_operand.vmem [shape: f32[3,1], index: 8, kind: input, shape index: {}]
  %s9 = inlined_call_operand.vmem [shape: f32[3,9216], index: 9, kind: input, shape index: {}]
  %s10 = inlined_call_operand.vmem [shape: f32[3,2048], index: 10, kind: output, shape index: {}]
  %s11 = sld [smem:[#allocation0]]
  $region73: #{_forward.1} parent=0
    _
  %s13 = ssub.s32 1, %s11
  %s14 = scalar_select 0, %s13, %s11
  loop: start=0, step=1, limit=4
  $region2: #{_forward.1} parent=0 // loop_pre_header
    _
  $region3: #{_forward.1} parent=0 // loop_header
    %s16 = sphi 0, %s20
    %p17 = scmp.ge.s32.totalorder %s16, 4
    %s26 = sphi 0, %s28
    %s29 = sphi 0, %s26
    %s30 = sphi 0, %s29
    %s46 = sphi 0, %s30
    %s50 = sphi 0, %s50
    %s52 = sphi 0, %s50
    %s53 = sphi 0, %s52
    %s67 = sphi 0, %s53
    %s71 = sphi 0, %s71
    %s73 = sphi 0, %s71
    %s74 = sphi 0, %s73
    %s88 = sphi 0, %s74
    %s92 = sphi 0, %s92
    %s94 = sphi 0, %s92
    %s95 = sphi 0, %s94
    %s109 = sphi 0, %s95
    %s113 = sphi 0, %s113
    %s115 = sphi 0, %s113
    %s116 = sphi 0, %s115
    %s130 = sphi 0, %s116
    %s134 = sphi 0, %s134
    %s136 = sphi 0, %s134
    %s137 = sphi 0, %s136
    %s151 = sphi 0, %s137
    %s155 = sphi 0, %s155
    %s157 = sphi 0, %s155
    %s158 = sphi 0, %s157
    %s172 = sphi 0, %s158
    %s176 = sphi 0, %s176
    %s178 = sphi 0, %s176
    %s179 = sphi 0, %s178
    %s193 = sphi 0, %s179
    %s197 = sphi 0, %s197
    %s199 = sphi 0, %s197
    %s200 = sphi 0, %s199
    %s214 = sphi 0, %s200
    %s218 = sphi 0, %s218
    %s220 = sphi 0, %s218
    %s221 = sphi 0, %s220
    %s235 = sphi 0, %s221
    %s241 = sphi 0, %s243
    %s244 = sphi 0, %s241
    %s245 = sphi 0, %s244
    %s261 = sphi 0, %s245
  $region4: #{_forward.1} parent=0 // loop_header_branch
    %19 = sbr.rel (%p17) target = $region8
  $region5: #{_forward.1} parent=0 // loop_body
    %s21 = ssub.s32 %s16, 1
    %s22 = ssub.s32 %s16, 2
    %s23 = sadd.s32 %s16, 1
    %s24 = ssub.s32 %s16, %s23
    %p25 = scmp.eq.s32.totalorder %s24, 0
    %s27 = sadd.s32 %s26, 1
    %s28 = scalar_select %p25, %s26, %s27
    %p31 = pneg %p25
    %p32 = scmp.eq.s32.totalorder %s16, 1
    %p33 = por %p31, %p32
    %p34 = scmp.ne.s32.totalorder %s26, %s29
    %p35 = scmp.eq.s32.totalorder %s16, 0
    %p36 = por %p34, %p35
    %p37 = scmp.ne.s32.totalorder %s26, %s29
    %p38 = scmp.eq.s32.totalorder %s21, 1
    %p39 = por %p37, %p38
    %p40 = scmp.ne.s32.totalorder %s29, %s30
    %p41 = scmp.eq.s32.totalorder %s21, 0
    %p42 = por %p40, %p41
    %p43 = scmp.ne.s32.totalorder %s29, %s30
    %p44 = scmp.eq.s32.totalorder %s22, 1
    %p45 = por %p43, %p44
    %p47 = scmp.ne.s32.totalorder %s30, %s46
    %p48 = scmp.eq.s32.totalorder %s22, 0
    %p49 = por %p47, %p48
    %s51 = sadd.s32 %s50, 1
    %p54 = scmp.eq.s32.totalorder %s16, 1
    %p55 = scmp.ne.s32.totalorder %s50, %s52
    %p56 = scmp.eq.s32.totalorder %s16, 0
    %p57 = por %p55, %p56
    %p58 = scmp.ne.s32.totalorder %s50, %s52
    %p59 = scmp.eq.s32.totalorder %s21, 1
    %p60 = por %p58, %p59
    %p61 = scmp.ne.s32.totalorder %s52, %s53
    %p62 = scmp.eq.s32.totalorder %s21, 0
    %p63 = por %p61, %p62
    %p64 = scmp.ne.s32.totalorder %s52, %s53
    %p65 = scmp.eq.s32.totalorder %s22, 1
    %p66 = por %p64, %p65
    %p68 = scmp.ne.s32.totalorder %s53, %s67
    %p69 = scmp.eq.s32.totalorder %s22, 0
    %p70 = por %p68, %p69
    %s72 = sadd.s32 %s71, 1
    %p75 = scmp.eq.s32.totalorder %s16, 1
    %p76 = scmp.ne.s32.totalorder %s71, %s73
    %p77 = scmp.eq.s32.totalorder %s16, 0
    %p78 = por %p76, %p77
    %p79 = scmp.ne.s32.totalorder %s71, %s73
    %p80 = scmp.eq.s32.totalorder %s21, 1
    %p81 = por %p79, %p80
    %p82 = scmp.ne.s32.totalorder %s73, %s74
    %p83 = scmp.eq.s32.totalorder %s21, 0
    %p84 = por %p82, %p83
    %p85 = scmp.ne.s32.totalorder %s73, %s74
    %p86 = scmp.eq.s32.totalorder %s22, 1
    %p87 = por %p85, %p86
    %p89 = scmp.ne.s32.totalorder %s74, %s88
    %p90 = scmp.eq.s32.totalorder %s22, 0
    %p91 = por %p89, %p90
    %s93 = sadd.s32 %s92, 1
    %p96 = scmp.eq.s32.totalorder %s16, 1
    %p97 = scmp.ne.s32.totalorder %s92, %s94
    %p98 = scmp.eq.s32.totalorder %s16, 0
    %p99 = por %p97, %p98
    %p100 = scmp.ne.s32.totalorder %s92, %s94
    %p101 = scmp.eq.s32.totalorder %s21, 1
    %p102 = por %p100, %p101
    %p103 = scmp.ne.s32.totalorder %s94, %s95
    %p104 = scmp.eq.s32.totalorder %s21, 0
    %p105 = por %p103, %p104
    %p106 = scmp.ne.s32.totalorder %s94, %s95
    %p107 = scmp.eq.s32.totalorder %s22, 1
    %p108 = por %p106, %p107
    %p110 = scmp.ne.s32.totalorder %s95, %s109
    %p111 = scmp.eq.s32.totalorder %s22, 0
    %p112 = por %p110, %p111
    %s114 = sadd.s32 %s113, 1
    %p117 = scmp.eq.s32.totalorder %s16, 1
    %p118 = scmp.ne.s32.totalorder %s113, %s115
    %p119 = scmp.eq.s32.totalorder %s16, 0
    %p120 = por %p118, %p119
    %p121 = scmp.ne.s32.totalorder %s113, %s115
    %p122 = scmp.eq.s32.totalorder %s21, 1
    %p123 = por %p121, %p122
    %p124 = scmp.ne.s32.totalorder %s115, %s116
    %p125 = scmp.eq.s32.totalorder %s21, 0
    %p126 = por %p124, %p125
    %p127 = scmp.ne.s32.totalorder %s115, %s116
    %p128 = scmp.eq.s32.totalorder %s22, 1
    %p129 = por %p127, %p128
    %p131 = scmp.ne.s32.totalorder %s116, %s130
    %p132 = scmp.eq.s32.totalorder %s22, 0
    %p133 = por %p131, %p132
    %s135 = sadd.s32 %s134, 1
    %p138 = scmp.eq.s32.totalorder %s16, 1
    %p139 = scmp.ne.s32.totalorder %s134, %s136
    %p140 = scmp.eq.s32.totalorder %s16, 0
    %p141 = por %p139, %p140
    %p142 = scmp.ne.s32.totalorder %s134, %s136
    %p143 = scmp.eq.s32.totalorder %s21, 1
    %p144 = por %p142, %p143
    %p145 = scmp.ne.s32.totalorder %s136, %s137
    %p146 = scmp.eq.s32.totalorder %s21, 0
    %p147 = por %p145, %p146
    %p148 = scmp.ne.s32.totalorder %s136, %s137
    %p149 = scmp.eq.s32.totalorder %s22, 1
    %p150 = por %p148, %p149
    %p152 = scmp.ne.s32.totalorder %s137, %s151
    %p153 = scmp.eq.s32.totalorder %s22, 0
    %p154 = por %p152, %p153
    %s156 = sadd.s32 %s155, 1
    %p159 = scmp.eq.s32.totalorder %s16, 1
    %p160 = scmp.ne.s32.totalorder %s155, %s157
    %p161 = scmp.eq.s32.totalorder %s16, 0
    %p162 = por %p160, %p161
    %p163 = scmp.ne.s32.totalorder %s155, %s157
    %p164 = scmp.eq.s32.totalorder %s21, 1
    %p165 = por %p163, %p164
    %p166 = scmp.ne.s32.totalorder %s157, %s158
    %p167 = scmp.eq.s32.totalorder %s21, 0
    %p168 = por %p166, %p167
    %p169 = scmp.ne.s32.totalorder %s157, %s158
    %p170 = scmp.eq.s32.totalorder %s22, 1
    %p171 = por %p169, %p170
    %p173 = scmp.ne.s32.totalorder %s158, %s172
    %p174 = scmp.eq.s32.totalorder %s22, 0
    %p175 = por %p173, %p174
    %s177 = sadd.s32 %s176, 1
    %p180 = scmp.eq.s32.totalorder %s16, 1
    %p181 = scmp.ne.s32.totalorder %s176, %s178
    %p182 = scmp.eq.s32.totalorder %s16, 0
    %p183 = por %p181, %p182
    %p184 = scmp.ne.s32.totalorder %s176, %s178
    %p185 = scmp.eq.s32.totalorder %s21, 1
    %p186 = por %p184, %p185
    %p187 = scmp.ne.s32.totalorder %s178, %s179
    %p188 = scmp.eq.s32.totalorder %s21, 0
    %p189 = por %p187, %p188
    %p190 = scmp.ne.s32.totalorder %s178, %s179
    %p191 = scmp.eq.s32.totalorder %s22, 1
    %p192 = por %p190, %p191
    %p194 = scmp.ne.s32.totalorder %s179, %s193
    %p195 = scmp.eq.s32.totalorder %s22, 0
    %p196 = por %p194, %p195
    %s198 = sadd.s32 %s197, 1
    %p201 = scmp.eq.s32.totalorder %s16, 1
    %p202 = scmp.ne.s32.totalorder %s197, %s199
    %p203 = scmp.eq.s32.totalorder %s16, 0
    %p204 = por %p202, %p203
    %p205 = scmp.ne.s32.totalorder %s197, %s199
    %p206 = scmp.eq.s32.totalorder %s21, 1
    %p207 = por %p205, %p206
    %p208 = scmp.ne.s32.totalorder %s199, %s200
    %p209 = scmp.eq.s32.totalorder %s21, 0
    %p210 = por %p208, %p209
    %p211 = scmp.ne.s32.totalorder %s199, %s200
    %p212 = scmp.eq.s32.totalorder %s22, 1
    %p213 = por %p211, %p212
    %p215 = scmp.ne.s32.totalorder %s200, %s214
    %p216 = scmp.eq.s32.totalorder %s22, 0
    %p217 = por %p215, %p216
    %s219 = sadd.s32 %s218, 1
    %p222 = scmp.eq.s32.totalorder %s16, 1
    %p223 = scmp.ne.s32.totalorder %s218, %s220
    %p224 = scmp.eq.s32.totalorder %s16, 0
    %p225 = por %p223, %p224
    %p226 = scmp.ne.s32.totalorder %s218, %s220
    %p227 = scmp.eq.s32.totalorder %s21, 1
    %p228 = por %p226, %p227
    %p229 = scmp.ne.s32.totalorder %s220, %s221
    %p230 = scmp.eq.s32.totalorder %s21, 0
    %p231 = por %p229, %p230
    %p232 = scmp.ne.s32.totalorder %s220, %s221
    %p233 = scmp.eq.s32.totalorder %s22, 1
    %p234 = por %p232, %p233
    %p236 = scmp.ne.s32.totalorder %s221, %s235
    %p237 = scmp.eq.s32.totalorder %s22, 0
    %p238 = por %p236, %p237
    %s239 = ssub.s32 %s16, %s23
    %p240 = scmp.eq.s32.totalorder %s239, 0
    %s242 = sadd.s32 %s241, 1
    %s243 = scalar_select %p240, %s241, %s242
    %p246 = pneg %p240
    %p247 = scmp.eq.s32.totalorder %s16, 1
    %p248 = por %p246, %p247
    %p249 = scmp.ne.s32.totalorder %s241, %s244
    %p250 = scmp.eq.s32.totalorder %s16, 0
    %p251 = por %p249, %p250
    %p252 = scmp.ne.s32.totalorder %s241, %s244
    %p253 = scmp.eq.s32.totalorder %s21, 1
    %p254 = por %p252, %p253
    %p255 = scmp.ne.s32.totalorder %s244, %s245
    %p256 = scmp.eq.s32.totalorder %s21, 0
    %p257 = por %p255, %p256
    %p258 = scmp.ne.s32.totalorder %s244, %s245
    %p259 = scmp.eq.s32.totalorder %s22, 1
    %p260 = por %p258, %p259
    %p262 = scmp.ne.s32.totalorder %s245, %s261
    %p263 = scmp.eq.s32.totalorder %s22, 0
    %p264 = por %p262, %p263
    %p265 = scmp.le.s32.totalorder 1, %s16
    %p266 = scmp.lt.s32.totalorder %s16, 3
    %p267 = pnand %p265, %p266
    %p268 = pneg %p267
    // Predicated region
    $region9: #{_forward.1} parent=5 // pred_check
      _
    $region10: #{_forward.1} parent=5 // pred_check_branch
      %270 = sbr.rel (%p267) target = $region12
    $region11: #{_forward.1} parent=5 // pred_region
      %s271 = ssub.s32 %s16, 1
      // Predicated region
      $region13: #{_forward.1} parent=11 // pred_check
        %p272 = pneg %p63
      $region14: #{_forward.1} parent=11 // pred_check_branch
        %274 = sbr.rel (%p272) target = $region16
      $region15: #{_forward.1} parent=11 // pred_region
        _
      $region16: #{_forward.1} parent=11 // pred_fallthru
        _
      // Predicated region
      $region17: #{_forward.1} parent=11 // pred_check
        %p275 = pneg %p84
      $region18: #{_forward.1} parent=11 // pred_check_branch
        %277 = sbr.rel (%p275) target = $region20
      $region19: #{_forward.1} parent=11 // pred_region
        _
      $region20: #{_forward.1} parent=11 // pred_fallthru
        _
      // Predicated region
      $region21: #{_forward.1} parent=11 // pred_check
        %p278 = pneg %p105
      $region22: #{_forward.1} parent=11 // pred_check_branch
        %280 = sbr.rel (%p278) target = $region24
      $region23: #{_forward.1} parent=11 // pred_region
        _
      $region24: #{_forward.1} parent=11 // pred_fallthru
        _
      // Predicated region
      $region25: #{_forward.1} parent=11 // pred_check
        %p281 = pneg %p126
      $region26: #{_forward.1} parent=11 // pred_check_branch
        %283 = sbr.rel (%p281) target = $region28
      $region27: #{_forward.1} parent=11 // pred_region
        _
      $region28: #{_forward.1} parent=11 // pred_fallthru
        _
      // Predicated region
      $region29: #{_forward.1} parent=11 // pred_check
        %p284 = pneg %p147
      $region30: #{_forward.1} parent=11 // pred_check_branch
        %286 = sbr.rel (%p284) target = $region32
      $region31: #{_forward.1} parent=11 // pred_region
        _
      $region32: #{_forward.1} parent=11 // pred_fallthru
        _
      // Predicated region
      $region33: #{_forward.1} parent=11 // pred_check
        %p287 = pneg %p168
      $region34: #{_forward.1} parent=11 // pred_check_branch
        %289 = sbr.rel (%p287) target = $region36
      $region35: #{_forward.1} parent=11 // pred_region
        _
      $region36: #{_forward.1} parent=11 // pred_fallthru
        _
      // Predicated region
      $region37: #{_forward.1} parent=11 // pred_check
        %p290 = pneg %p189
      $region38: #{_forward.1} parent=11 // pred_check_branch
        %292 = sbr.rel (%p290) target = $region40
      $region39: #{_forward.1} parent=11 // pred_region
        _
      $region40: #{_forward.1} parent=11 // pred_fallthru
        _
      // Predicated region
      $region41: #{_forward.1} parent=11 // pred_check
        %p293 = pneg %p210
      $region42: #{_forward.1} parent=11 // pred_check_branch
        %295 = sbr.rel (%p293) target = $region44
      $region43: #{_forward.1} parent=11 // pred_region
        _
      $region44: #{_forward.1} parent=11 // pred_fallthru
        _
      // Predicated region
      $region45: #{_forward.1} parent=11 // pred_check
        %p296 = pneg %p231
      $region46: #{_forward.1} parent=11 // pred_check_branch
        %298 = sbr.rel (%p296) target = $region48
      $region47: #{_forward.1} parent=11 // pred_region
        _
      $region48: #{_forward.1} parent=11 // pred_fallthru
        _
    $region12: #{_forward.1} parent=5 // pred_fallthru
      _
    %p299 = scmp.lt.s32.totalorder %s16, 2
    // Predicated region
    $region49: #{_forward.1} parent=5 // pred_check
      %p300 = pneg %p299
    $region50: #{_forward.1} parent=5 // pred_check_branch
      %302 = sbr.rel (%p300) target = $region52
    $region51: #{_forward.1} parent=5 // pred_region
      // Predicated region
      $region53: #{_forward.1} parent=51 // pred_check
        %p303 = pneg %p36
      $region54: #{_forward.1} parent=51 // pred_check_branch
        %305 = sbr.rel (%p303) target = $region56
      $region55: #{_forward.1} parent=51 // pred_region
        %s306 = smul.u32 8, %s16
        %p307 = scmp.lt.s32.totalorder %s306, 15
        %s308 = scalar_select %p307, %s306, 15
        %s309 = smul.addr %s308, 4
        %s310 = scalar_lea.vmem %s0, %s309
        %s311 = smul.u32 8, %s16
      $region56: #{_forward.1} parent=51 // pred_fallthru
        _
    $region52: #{_forward.1} parent=5 // pred_fallthru
      _
    %p312 = scmp.le.s32.totalorder 1, %s16
    %p313 = scmp.lt.s32.totalorder %s16, 3
    %p314 = pnand %p312, %p313
    %p315 = pneg %p314
    // Predicated region
    $region57: #{_forward.1} parent=5 // pred_check
      _
    $region58: #{_forward.1} parent=5 // pred_check_branch
      %317 = sbr.rel (%p314) target = $region60
    $region59: #{_forward.1} parent=5 // pred_region
      %s318 = ssub.s32 %s16, 1
      %s319 = smul.u32 8, %s21
      %p320 = scmp.lt.s32.totalorder %s319, 15
      %s321 = scalar_select %p320, %s319, 15
      %s322 = smul.addr %s321, 4
      %s323 = scalar_lea.vmem %s0, %s322
      %p324 = pneg %p42
      %p325 = pneg %p39
      %p326 = pneg %p63
      %p327 = pneg %p60
      %p328 = pneg %p84
      %p329 = pneg %p81
      %p330 = pneg %p105
      %p331 = pneg %p102
      %p332 = pneg %p126
      %p333 = pneg %p123
      %p334 = pneg %p147
      %p335 = pneg %p144
      %p336 = pneg %p168
      %p337 = pneg %p165
      %p338 = pneg %p189
      %p339 = pneg %p186
      %p340 = pneg %p210
      %p341 = pneg %p207
      %p342 = pneg %p231
      %p343 = pneg %p228
      %p344 = pneg %p257
      %p345 = pneg %p254
      %s346 = smul.u32 8, %s21
      %p347 = scmp.lt.s32.totalorder %s346, 15
      %s348 = scalar_select %p347, %s346, 15
      %s349 = smul.addr %s348, 4
      %s350 = scalar_lea.vmem %s10, %s349
      %s351 = smul.u32 8, %s21
      %p352 = scmp.lt.s32.totalorder %s351, 15
      %s353 = scalar_select %p352, %s351, 15
      %s354 = smul.addr %s353, 4
      %s355 = scalar_lea.vmem %s0, %s354
      %s356 = smul.u32 8, %s21
      %s357 = smul.u32 8, %s21
      %p358 = scmp.lt.s32.totalorder %s357, 15
      %s359 = scalar_select %p358, %s357, 15
      %s360 = smul.addr %s359, 4
      %s361 = scalar_lea.vmem %s10, %s360
      %s362 = smul.u32 8, %s21
      %v363 = vld [vmem:[%s355] sm:$0x77]
      %v364 = vld [vmem:[%s355 + $0x8] sm:$0x77]
      %v365 = vld [vmem:[%s355 + $0x10] sm:$0x77]
      %v366 = vld [vmem:[%s355 + $0x18] sm:$0x77]
      %v367 = vld [vmem:[%s1] sm:$0xff]
      %v368 = vld [vmem:[%s1 + $0x8] sm:$0xff]
      %v369 = vld [vmem:[%s1 + $0x10] sm:$0xff]
      %v370 = vld [vmem:[%s1 + $0x18] sm:$0xff]
      %v371 = vld [vmem:[%s1 + $0x20] sm:$0xff]
      %v372 = vld [vmem:[%s1 + $0x28] sm:$0xff]
      %v373 = vld [vmem:[%s1 + $0x30] sm:$0xff]
      %v374 = vld [vmem:[%s1 + $0x38] sm:$0xff]
      %v375 = vld [vmem:[%s2] sm:$0xff]
      %v376 = vld [vmem:[%s2 + $0x8] sm:$0xff]
      %v377 = vld [vmem:[%s2 + $0x10] sm:$0xff]
      %v378 = vld [vmem:[%s2 + $0x18] sm:$0xff]
      %v379 = vld [vmem:[%s2 + $0x20] sm:$0xff]
      %v380 = vld [vmem:[%s2 + $0x28] sm:$0xff]
      %v381 = vld [vmem:[%s2 + $0x30] sm:$0xff]
      %v382 = vld [vmem:[%s2 + $0x38] sm:$0xff]
      %384 = vset.pattern.permute.xlu0 0
      %385 = vperm.xlu0 %384, %v375
      %v386 = vpop.permute.xlu0 %385
      %389 = vset.pattern.permute.xlu0 0
      %390 = vperm.xlu0 %389, %v376
      %v391 = vpop.permute.xlu0 %390
      %394 = vset.pattern.permute.xlu0 0
      %395 = vperm.xlu0 %394, %v377
      %v396 = vpop.permute.xlu0 %395
      %399 = vset.pattern.permute.xlu0 0
      %400 = vperm.xlu0 %399, %v378
      %v401 = vpop.permute.xlu0 %400
      %404 = vset.pattern.permute.xlu0 0
      %405 = vperm.xlu0 %404, %v379
      %v406 = vpop.permute.xlu0 %405
      %409 = vset.pattern.permute.xlu0 0
      %410 = vperm.xlu0 %409, %v380
      %v411 = vpop.permute.xlu0 %410
      %414 = vset.pattern.permute.xlu0 0
      %415 = vperm.xlu0 %414, %v381
      %v416 = vpop.permute.xlu0 %415
      %419 = vset.pattern.permute.xlu0 0
      %420 = vperm.xlu0 %419, %v382
      %v421 = vpop.permute.xlu0 %420
      %v427 = vcombine.high %v363, %v363
      %v428 = vcombine.high %v364, %v364
      %v429 = vcombine.high %v365, %v365
      %v430 = vcombine.high %v366, %v366
      %vm431 = vcmask 23552
      %v433 = vsel %vm431, %v367, 0
      %v436 = vsel %vm431, %v368, 0
      %v439 = vsel %vm431, %v369, 0
      %v442 = vsel %vm431, %v370, 0
      %v445 = vsel %vm431, %v371, 0
      %v448 = vsel %vm431, %v372, 0
      %v451 = vsel %vm431, %v373, 0
      %v454 = vsel %vm431, %v374, 0
      %vm456 = vcmask 1042432
      %v457 = vsel %vm456, %v363, 0
      %v459 = vsel %vm456, %v427, 0
      %v461 = vsel %vm456, %v364, 0
      %v463 = vsel %vm456, %v428, 0
      %v465 = vsel %vm456, %v365, 0
      %v467 = vsel %vm456, %v429, 0
      %v469 = vsel %vm456, %v366, 0
      %v471 = vsel %vm456, %v430, 0
      %473 = vmatprep.subr.mxu0 %v459
      %474 = vmatpush1.msra.mxu0 %v457
      %475 = vmatprep.subr.mxu0 0.0
      %476 = vmatpush1.msra.mxu0 0.0
      %477 = vmatprep.subr.mxu0 0.0
      %478 = vmatpush1.msra.mxu0 0.0
      %479 = vmatprep.subr.mxu0 0.0
      %480 = vmatpush1.msra.mxu0 0.0
      %481 = vmatprep.subr.mxu0 0.0
      %482 = vmatpush1.msra.mxu0 0.0
      %483 = vmatprep.subr.mxu0 0.0
      %484 = vmatpush1.msra.mxu0 0.0
      %485 = vmatprep.subr.mxu0 0.0
      %486 = vmatpush1.msra.mxu0 0.0
      %487 = vmatprep.subr.mxu0 0.0
      %488 = vmatpush1.msra.mxu0 0.0
      %489 = vmatprep.subr.mxu0 0.0
      %490 = vmatpush1.msra.mxu0 0.0
      %491 = vmatprep.subr.mxu0 0.0
      %492 = vmatpush1.msra.mxu0 0.0
      %493 = vmatprep.subr.mxu0 0.0
      %494 = vmatpush1.msra.mxu0 0.0
      %495 = vmatprep.subr.mxu0 0.0
      %496 = vmatpush1.msra.mxu0 0.0
      %497 = vmatprep.subr.mxu0 0.0
      %498 = vmatpush1.msra.mxu0 0.0
      %499 = vmatprep.subr.mxu0 0.0
      %500 = vmatpush1.msra.mxu0 0.0
      %501 = vmatprep.subr.mxu0 0.0
      %502 = vmatpush1.msra.mxu0 0.0
      %503 = vmatprep.subr.mxu0 0.0
      %504 = vmatpush1.msra.mxu0 0.0
      %505 = vmatprep.subr.mxu0 0.0
      %506 = vmatpush1.msra.mxu0 0.0
      %507 = vmatprep.subr.mxu0 0.0
      %508 = vmatpush1.msra.mxu0 0.0
      %509 = vmatprep.subr.mxu0 0.0
      %510 = vmatpush1.msra.mxu0 0.0
      %511 = vmatprep.subr.mxu0 0.0
      %512 = vmatpush1.msra.mxu0 0.0
      %513 = vmatprep.subr.mxu0 0.0
      %514 = vmatpush1.msra.mxu0 0.0
      %515 = vmatprep.subr.mxu0 0.0
      %516 = vmatpush1.msra.mxu0 0.0
      %517 = vmatprep.subr.mxu0 0.0
      %518 = vmatpush1.msra.mxu0 0.0
      %519 = vmatprep.subr.mxu0 0.0
      %520 = vmatpush1.msra.mxu0 0.0
      %521 = vmatprep.subr.mxu0 0.0
      %522 = vmatpush1.msra.mxu0 0.0
      %523 = vmatprep.subr.mxu0 0.0
      %524 = vmatpush1.msra.mxu0 0.0
      %525 = vmatprep.subr.mxu0 0.0
      %526 = vmatpush1.msra.mxu0 0.0
      %527 = vmatprep.subr.mxu0 0.0
      %528 = vmatpush1.msra.mxu0 0.0
      %529 = vmatprep.subr.mxu0 0.0
      %530 = vmatpush1.msra.mxu0 0.0
      %531 = vmatprep.subr.mxu0 0.0
      %532 = vmatpush1.msra.mxu0 0.0
      %533 = vmatprep.subr.mxu0 0.0
      %534 = vmatpush1.msra.mxu0 0.0
      %535 = vmatprep.subr.mxu0 0.0
      %536 = vmatpush1.msra.mxu0 0.0
      %537 = vmatprep.mubr.f32.mxu0 0.0
      %538 = vmatmul.mubr.f32.gmra.mrb[0].mxu0 %v433
      %v539 = vpop.f32.mrb[0].mxu0
      %v540 = vadd.f32 %v386, %v539
      %v541 = vpop.f32.mrb[0].mxu0
      %v542 = vadd.f32 %v386, %v541
      %543 = vmatprep.mubr.f32.mxu0 0.0
      %544 = vmatmul.mubr.f32.gmra.mrb[0].mxu0 %v436
      %v545 = vpop.f32.mrb[0].mxu0
      %v546 = vadd.f32 %v391, %v545
      %v547 = vpop.f32.mrb[0].mxu0
      %v548 = vadd.f32 %v391, %v547
      %549 = vmatprep.mubr.f32.mxu0 0.0
      %550 = vmatmul.mubr.f32.gmra.mrb[0].mxu0 %v439
      %v551 = vpop.f32.mrb[0].mxu0
      %v552 = vadd.f32 %v396, %v551
      %v553 = vpop.f32.mrb[0].mxu0
      %v554 = vadd.f32 %v396, %v553
      %555 = vmatprep.mubr.f32.mxu0 0.0
      %556 = vmatmul.mubr.f32.gmra.mrb[0].mxu0 %v442
      %v557 = vpop.f32.mrb[0].mxu0
      %v558 = vadd.f32 %v401, %v557
      %v559 = vpop.f32.mrb[0].mxu0
      %v560 = vadd.f32 %v401, %v559
      %561 = vmatprep.mubr.f32.mxu0 0.0
      %562 = vmatmul.mubr.f32.gmra.mrb[0].mxu0 %v445
      %v563 = vpop.f32.mrb[0].mxu0
      %v564 = vadd.f32 %v406, %v563
      %v565 = vpop.f32.mrb[0].mxu0
      %v566 = vadd.f32 %v406, %v565
      %567 = vmatprep.mubr.f32.mxu0 0.0
      %568 = vmatmul.mubr.f32.gmra.mrb[0].mxu0 %v448
      %v569 = vpop.f32.mrb[0].mxu0
      %v570 = vadd.f32 %v411, %v569
      %v571 = vpop.f32.mrb[0].mxu0
      %v572 = vadd.f32 %v411, %v571
      %573 = vmatprep.mubr.f32.mxu0 0.0
      %574 = vmatmul.mubr.f32.gmra.mrb[0].mxu0 %v451
      %v575 = vpop.f32.mrb[0].mxu0
      %v576 = vadd.f32 %v416, %v575
      %v577 = vpop.f32.mrb[0].mxu0
      %v578 = vadd.f32 %v416, %v577
      %579 = vmatprep.mubr.f32.mxu0 0.0
      %580 = vmatmul.mubr.f32.gmra.mrb[0].mxu0 %v454
      %v581 = vpop.f32.mrb[0].mxu0
      %v582 = vadd.f32 %v421, %v581
      %v583 = vpop.f32.mrb[0].mxu0
      %v584 = vadd.f32 %v421, %v583
      %585 = vdwg.mxu0
      %586 = vmatprep.subr.mxu0 %v463
      %587 = vmatpush1.msra.mxu0 %v461
      %588 = vmatprep.subr.mxu0 0.0
      %589 = vmatpush1.msra.mxu0 0.0
      %590 = vmatprep.subr.mxu0 0.0
      %591 = vmatpush1.msra.mxu0 0.0
      %592 = vmatprep.subr.mxu0 0.0
      %593 = vmatpush1.msra.mxu0 0.0
      %594 = vmatprep.subr.mxu0 0.0
      %595 = vmatpush1.msra.mxu0 0.0
      %596 = vmatprep.subr.mxu0 0.0
      %597 = vmatpush1.msra.mxu0 0.0
      %598 = vmatprep.subr.mxu0 0.0
      %599 = vmatpush1.msra.mxu0 0.0
      %600 = vmatprep.subr.mxu0 0.0
      %601 = vmatpush1.msra.mxu0 0.0
      %602 = vmatprep.subr.mxu0 0.0
      %603 = vmatpush1.msra.mxu0 0.0
      %604 = vmatprep.subr.mxu0 0.0
      %605 = vmatpush1.msra.mxu0 0.0
      %606 = vmatprep.subr.mxu0 0.0
      %607 = vmatpush1.msra.mxu0 0.0
      %608 = vmatprep.subr.mxu0 0.0
      %609 = vmatpush1.msra.mxu0 0.0
      %610 = vmatprep.subr.mxu0 0.0
      %611 = vmatpush1.msra.mxu0 0.0
      %612 = vmatprep.subr.mxu0 0.0
      %613 = vmatpush1.msra.mxu0 0.0
      %614 = vmatprep.subr.mxu0 0.0
      %615 = vmatpush1.msra.mxu0 0.0
      %616 = vmatprep.subr.mxu0 0.0
      %617 = vmatpush1.msra.mxu0 0.0
      %618 = vmatprep.subr.mxu0 0.0
      %619 = vmatpush1.msra.mxu0 0.0
      %620 = vmatprep.subr.mxu0 0.0
      %621 = vmatpush1.msra.mxu0 0.0
      %622 = vmatprep.subr.mxu0 0.0
      %623 = vmatpush1.msra.mxu0 0.0
      %624 = vmatprep.subr.mxu0 0.0
      %625 = vmatpush1.msra.mxu0 0.0
      %626 = vmatprep.subr.mxu0 0.0
      %627 = vmatpush1.msra.mxu0 0.0
      %628 = vmatprep.subr.mxu0 0.0
      %629 = vmatpush1.msra.mxu0 0.0
      %630 = vmatprep.subr.mxu0 0.0
      %631 = vmatpush1.msra.mxu0 0.0
      %632 = vmatprep.subr.mxu0 0.0
      %633 = vmatpush1.msra.mxu0 0.0
      %634 = vmatprep.subr.mxu0 0.0
      %635 = vmatpush1.msra.mxu0 0.0
      %636 = vmatprep.subr.mxu0 0.0
      %637 = vmatpush1.msra.mxu0 0.0
      %638 = vmatprep.subr.mxu0 0.0
      %639 = vmatpush1.msra.mxu0 0.0
      %640 = vmatprep.subr.mxu0 0.0
      %641 = vmatpush1.msra.mxu0 0.0
      %642 = vmatprep.subr.mxu0 0.0
      %643 = vmatpush1.msra.mxu0 0.0
      %644 = vmatprep.subr.mxu0 0.0
      %645 = vmatpush1.msra.mxu0 0.0
      %646 = vmatprep.subr.mxu0 0.0
      %647 = vmatpush1.msra.mxu0 0.0
      %648 = vmatprep.subr.mxu0 0.0
      %649 = vmatpush1.msra.mxu0 0.0
      %650 = vmatprep.mubr.f32.mxu0 0.0
      %651 = vmatmul.mubr.f32.gmra.mrb[0].mxu0 %v433
      %v652 = vpop.f32.mrb[0].mxu0
      %v653 = vadd.f32 %v386, %v652
      %v654 = vpop.f32.mrb[0].mxu0
      %v655 = vadd.f32 %v386, %v654
      %656 = vmatprep.mubr.f32.mxu0 0.0
      %657 = vmatmul.mubr.f32.gmra.mrb[0].mxu0 %v436
      %v658 = vpop.f32.mrb[0].mxu0
      %v659 = vadd.f32 %v391, %v658
      %v660 = vpop.f32.mrb[0].mxu0
      %v661 = vadd.f32 %v391, %v660
      %662 = vmatprep.mubr.f32.mxu0 0.0
      %663 = vmatmul.mubr.f32.gmra.mrb[0].mxu0 %v439
      %v664 = vpop.f32.mrb[0].mxu0
      %v665 = vadd.f32 %v396, %v664
      %v666 = vpop.f32.mrb[0].mxu0
      %v667 = vadd.f32 %v396, %v666
      %668 = vmatprep.mubr.f32.mxu0 0.0
      %669 = vmatmul.mubr.f32.gmra.mrb[0].mxu0 %v442
      %v670 = vpop.f32.mrb[0].mxu0
      %v671 = vadd.f32 %v401, %v670
      %v672 = vpop.f32.mrb[0].mxu0
      %v673 = vadd.f32 %v401, %v672
      %674 = vmatprep.mubr.f32.mxu0 0.0
      %675 = vmatmul.mubr.f32.gmra.mrb[0].mxu0 %v445
      %v676 = vpop.f32.mrb[0].mxu0
      %v677 = vadd.f32 %v406, %v676
      %v678 = vpop.f32.mrb[0].mxu0
      %v679 = vadd.f32 %v406, %v678
      %680 = vmatprep.mubr.f32.mxu0 0.0
      %681 = vmatmul.mubr.f32.gmra.mrb[0].mxu0 %v448
      %v682 = vpop.f32.mrb[0].mxu0
      %v683 = vadd.f32 %v411, %v682
      %v684 = vpop.f32.mrb[0].mxu0
      %v685 = vadd.f32 %v411, %v684
      %686 = vmatprep.mubr.f32.mxu0 0.0
      %687 = vmatmul.mubr.f32.gmra.mrb[0].mxu0 %v451
      %v688 = vpop.f32.mrb[0].mxu0
      %v689 = vadd.f32 %v416, %v688
      %v690 = vpop.f32.mrb[0].mxu0
      %v691 = vadd.f32 %v416, %v690
      %692 = vmatprep.mubr.f32.mxu0 0.0
      %693 = vmatmul.mubr.f32.gmra.mrb[0].mxu0 %v454
      %v694 = vpop.f32.mrb[0].mxu0
      %v695 = vadd.f32 %v421, %v694
      %v696 = vpop.f32.mrb[0].mxu0
      %v697 = vadd.f32 %v421, %v696
      %698 = vdwg.mxu0
      %699 = vmatprep.subr.mxu0 %v467
      %700 = vmatpush1.msra.mxu0 %v465
      %701 = vmatprep.subr.mxu0 0.0
      %702 = vmatpush1.msra.mxu0 0.0
      %703 = vmatprep.subr.mxu0 0.0
      %704 = vmatpush1.msra.mxu0 0.0
      %705 = vmatprep.subr.mxu0 0.0
      %706 = vmatpush1.msra.mxu0 0.0
      %707 = vmatprep.subr.mxu0 0.0
      %708 = vmatpush1.msra.mxu0 0.0
      %709 = vmatprep.subr.mxu0 0.0
      %710 = vmatpush1.msra.mxu0 0.0
      %711 = vmatprep.subr.mxu0 0.0
      %712 = vmatpush1.msra.mxu0 0.0
      %713 = vmatprep.subr.mxu0 0.0
      %714 = vmatpush1.msra.mxu0 0.0
      %715 = vmatprep.subr.mxu0 0.0
      %716 = vmatpush1.msra.mxu0 0.0
      %717 = vmatprep.subr.mxu0 0.0
      %718 = vmatpush1.msra.mxu0 0.0
      %719 = vmatprep.subr.mxu0 0.0
      %720 = vmatpush1.msra.mxu0 0.0
      %721 = vmatprep.subr.mxu0 0.0
      %722 = vmatpush1.msra.mxu0 0.0
      %723 = vmatprep.subr.mxu0 0.0
      %724 = vmatpush1.msra.mxu0 0.0
      %725 = vmatprep.subr.mxu0 0.0
      %726 = vmatpush1.msra.mxu0 0.0
      %727 = vmatprep.subr.mxu0 0.0
      %728 = vmatpush1.msra.mxu0 0.0
      %729 = vmatprep.subr.mxu0 0.0
      %730 = vmatpush1.msra.mxu0 0.0
      %731 = vmatprep.subr.mxu0 0.0
      %732 = vmatpush1.msra.mxu0 0.0
      %733 = vmatprep.subr.mxu0 0.0
      %734 = vmatpush1.msra.mxu0 0.0
      %735 = vmatprep.subr.mxu0 0.0
      %736 = vmatpush1.msra.mxu0 0.0
      %737 = vmatprep.subr.mxu0 0.0
      %738 = vmatpush1.msra.mxu0 0.0
      %739 = vmatprep.subr.mxu0 0.0
      %740 = vmatpush1.msra.mxu0 0.0
      %741 = vmatprep.subr.mxu0 0.0
      %742 = vmatpush1.msra.mxu0 0.0
      %743 = vmatprep.subr.mxu0 0.0
      %744 = vmatpush1.msra.mxu0 0.0
      %745 = vmatprep.subr.mxu0 0.0
      %746 = vmatpush1.msra.mxu0 0.0
      %747 = vmatprep.subr.mxu0 0.0
      %748 = vmatpush1.msra.mxu0 0.0
      %749 = vmatprep.subr.mxu0 0.0
      %750 = vmatpush1.msra.mxu0 0.0
      %751 = vmatprep.subr.mxu0 0.0
      %752 = vmatpush1.msra.mxu0 0.0
      %753 = vmatprep.subr.mxu0 0.0
      %754 = vmatpush1.msra.mxu0 0.0
      %755 = vmatprep.subr.mxu0 0.0
      %756 = vmatpush1.msra.mxu0 0.0
      %757 = vmatprep.subr.mxu0 0.0
      %758 = vmatpush1.msra.mxu0 0.0
      %759 = vmatprep.subr.mxu0 0.0
      %760 = vmatpush1.msra.mxu0 0.0
      %761 = vmatprep.subr.mxu0 0.0
      %762 = vmatpush1.msra.mxu0 0.0
      %763 = vmatprep.mubr.f32.mxu0 0.0
      %764 = vmatmul.mubr.f32.gmra.mrb[0].mxu0 %v433
      %v765 = vpop.f32.mrb[0].mxu0
      %v766 = vadd.f32 %v386, %v765
      %v767 = vpop.f32.mrb[0].mxu0
      %v768 = vadd.f32 %v386, %v767
      %769 = vmatprep.mubr.f32.mxu0 0.0
      %770 = vmatmul.mubr.f32.gmra.mrb[0].mxu0 %v436
      %v771 = vpop.f32.mrb[0].mxu0
      %v772 = vadd.f32 %v391, %v771
      %v773 = vpop.f32.mrb[0].mxu0
      %v774 = vadd.f32 %v391, %v773
      %775 = vmatprep.mubr.f32.mxu0 0.0
      %776 = vmatmul.mubr.f32.gmra.mrb[0].mxu0 %v439
      %v777 = vpop.f32.mrb[0].mxu0
      %v778 = vadd.f32 %v396, %v777
      %v779 = vpop.f32.mrb[0].mxu0
      %v780 = vadd.f32 %v396, %v779
      %781 = vmatprep.mubr.f32.mxu0 0.0
      %782 = vmatmul.mubr.f32.gmra.mrb[0].mxu0 %v442
      %v783 = vpop.f32.mrb[0].mxu0
      %v784 = vadd.f32 %v401, %v783
      %v785 = vpop.f32.mrb[0].mxu0
      %v786 = vadd.f32 %v401, %v785
      %787 = vmatprep.mubr.f32.mxu0 0.0
      %788 = vmatmul.mubr.f32.gmra.mrb[0].mxu0 %v445
      %v789 = vpop.f32.mrb[0].mxu0
      %v790 = vadd.f32 %v406, %v789
      %v791 = vpop.f32.mrb[0].mxu0
      %v792 = vadd.f32 %v406, %v791
      %793 = vmatprep.mubr.f32.mxu0 0.0
      %794 = vmatmul.mubr.f32.gmra.mrb[0].mxu0 %v448
      %v795 = vpop.f32.mrb[0].mxu0
      %v796 = vadd.f32 %v411, %v795
      %v797 = vpop.f32.mrb[0].mxu0
      %v798 = vadd.f32 %v411, %v797
      %799 = vmatprep.mubr.f32.mxu0 0.0
      %800 = vmatmul.mubr.f32.gmra.mrb[0].mxu0 %v451
      %v801 = vpop.f32.mrb[0].mxu0
      %v802 = vadd.f32 %v416, %v801
      %v803 = vpop.f32.mrb[0].mxu0
      %v804 = vadd.f32 %v416, %v803
      %805 = vmatprep.mubr.f32.mxu0 0.0
      %806 = vmatmul.mubr.f32.gmra.mrb[0].mxu0 %v454
      %v807 = vpop.f32.mrb[0].mxu0
      %v808 = vadd.f32 %v421, %v807
      %v809 = vpop.f32.mrb[0].mxu0
      %v810 = vadd.f32 %v421, %v809
      %811 = vdwg.mxu0
      %812 = vmatprep.subr.mxu0 %v471
      %813 = vmatpush1.msra.mxu0 %v469
      %814 = vmatprep.subr.mxu0 0.0
      %815 = vmatpush1.msra.mxu0 0.0
      %816 = vmatprep.subr.mxu0 0.0
      %817 = vmatpush1.msra.mxu0 0.0
      %818 = vmatprep.subr.mxu0 0.0
      %819 = vmatpush1.msra.mxu0 0.0
      %820 = vmatprep.subr.mxu0 0.0
      %821 = vmatpush1.msra.mxu0 0.0
      %822 = vmatprep.subr.mxu0 0.0
      %823 = vmatpush1.msra.mxu0 0.0
      %824 = vmatprep.subr.mxu0 0.0
      %825 = vmatpush1.msra.mxu0 0.0
      %826 = vmatprep.subr.mxu0 0.0
      %827 = vmatpush1.msra.mxu0 0.0
      %828 = vmatprep.subr.mxu0 0.0
      %829 = vmatpush1.msra.mxu0 0.0
      %830 = vmatprep.subr.mxu0 0.0
      %831 = vmatpush1.msra.mxu0 0.0
      %832 = vmatprep.subr.mxu0 0.0
      %833 = vmatpush1.msra.mxu0 0.0
      %834 = vmatprep.subr.mxu0 0.0
      %835 = vmatpush1.msra.mxu0 0.0
      %836 = vmatprep.subr.mxu0 0.0
      %837 = vmatpush1.msra.mxu0 0.0
      %838 = vmatprep.subr.mxu0 0.0
      %839 = vmatpush1.msra.mxu0 0.0
      %840 = vmatprep.subr.mxu0 0.0
      %841 = vmatpush1.msra.mxu0 0.0
      %842 = vmatprep.subr.mxu0 0.0
      %843 = vmatpush1.msra.mxu0 0.0
      %844 = vmatprep.subr.mxu0 0.0
      %845 = vmatpush1.msra.mxu0 0.0
      %846 = vmatprep.subr.mxu0 0.0
      %847 = vmatpush1.msra.mxu0 0.0
      %848 = vmatprep.subr.mxu0 0.0
      %849 = vmatpush1.msra.mxu0 0.0
      %850 = vmatprep.subr.mxu0 0.0
      %851 = vmatpush1.msra.mxu0 0.0
      %852 = vmatprep.subr.mxu0 0.0
      %853 = vmatpush1.msra.mxu0 0.0
      %854 = vmatprep.subr.mxu0 0.0
      %855 = vmatpush1.msra.mxu0 0.0
      %856 = vmatprep.subr.mxu0 0.0
      %857 = vmatpush1.msra.mxu0 0.0
      %858 = vmatprep.subr.mxu0 0.0
      %859 = vmatpush1.msra.mxu0 0.0
      %860 = vmatprep.subr.mxu0 0.0
      %861 = vmatpush1.msra.mxu0 0.0
      %862 = vmatprep.subr.mxu0 0.0
      %863 = vmatpush1.msra.mxu0 0.0
      %864 = vmatprep.subr.mxu0 0.0
      %865 = vmatpush1.msra.mxu0 0.0
      %866 = vmatprep.subr.mxu0 0.0
      %867 = vmatpush1.msra.mxu0 0.0
      %868 = vmatprep.subr.mxu0 0.0
      %869 = vmatpush1.msra.mxu0 0.0
      %870 = vmatprep.subr.mxu0 0.0
      %871 = vmatpush1.msra.mxu0 0.0
      %872 = vmatprep.subr.mxu0 0.0
      %873 = vmatpush1.msra.mxu0 0.0
      %874 = vmatprep.subr.mxu0 0.0
      %875 = vmatpush1.msra.mxu0 0.0
      %876 = vmatprep.mubr.f32.mxu0 0.0
      %877 = vmatmul.mubr.f32.gmra.mrb[0].mxu0 %v433
      %v878 = vpop.f32.mrb[0].mxu0
      %v879 = vadd.f32 %v386, %v878
      %v880 = vpop.f32.mrb[0].mxu0
      %v881 = vadd.f32 %v386, %v880
      %882 = vmatprep.mubr.f32.mxu0 0.0
      %883 = vmatmul.mubr.f32.gmra.mrb[0].mxu0 %v436
      %v884 = vpop.f32.mrb[0].mxu0
      %v885 = vadd.f32 %v391, %v884
      %v886 = vpop.f32.mrb[0].mxu0
      %v887 = vadd.f32 %v391, %v886
      %888 = vmatprep.mubr.f32.mxu0 0.0
      %889 = vmatmul.mubr.f32.gmra.mrb[0].mxu0 %v439
      %v890 = vpop.f32.mrb[0].mxu0
      %v891 = vadd.f32 %v396, %v890
      %v892 = vpop.f32.mrb[0].mxu0
      %v893 = vadd.f32 %v396, %v892
      %894 = vmatprep.mubr.f32.mxu0 0.0
      %895 = vmatmul.mubr.f32.gmra.mrb[0].mxu0 %v442
      %v896 = vpop.f32.mrb[0].mxu0
      %v897 = vadd.f32 %v401, %v896
      %v898 = vpop.f32.mrb[0].mxu0
      %v899 = vadd.f32 %v401, %v898
      %900 = vmatprep.mubr.f32.mxu0 0.0
      %901 = vmatmul.mubr.f32.gmra.mrb[0].mxu0 %v445
      %v902 = vpop.f32.mrb[0].mxu0
      %v903 = vadd.f32 %v406, %v902
      %v904 = vpop.f32.mrb[0].mxu0
      %v905 = vadd.f32 %v406, %v904
      %906 = vmatprep.mubr.f32.mxu0 0.0
      %907 = vmatmul.mubr.f32.gmra.mrb[0].mxu0 %v448
      %v908 = vpop.f32.mrb[0].mxu0
      %v909 = vadd.f32 %v411, %v908
      %v910 = vpop.f32.mrb[0].mxu0
      %v911 = vadd.f32 %v411, %v910
      %912 = vmatprep.mubr.f32.mxu0 0.0
      %913 = vmatmul.mubr.f32.gmra.mrb[0].mxu0 %v451
      %v914 = vpop.f32.mrb[0].mxu0
      %v915 = vadd.f32 %v416, %v914
      %v916 = vpop.f32.mrb[0].mxu0
      %v917 = vadd.f32 %v416, %v916
      %918 = vmatprep.mubr.f32.mxu0 0.0
      %919 = vmatmul.mubr.f32.gmra.mrb[0].mxu0 %v454
      %v920 = vpop.f32.mrb[0].mxu0
      %v921 = vadd.f32 %v421, %v920
      %v922 = vpop.f32.mrb[0].mxu0
      %v923 = vadd.f32 %v421, %v922
      %924 = vdwg.mxu0
      %v925 = vmax.f32 %v540, 0.0
      %v926 = vmax.f32 %v542, 0.0
      %v927 = vmax.f32 %v653, 0.0
      %v928 = vmax.f32 %v655, 0.0
      %v929 = vmax.f32 %v766, 0.0
      %v930 = vmax.f32 %v768, 0.0
      %v931 = vmax.f32 %v879, 0.0
      %v932 = vmax.f32 %v881, 0.0
      %v933 = vmax.f32 %v546, 0.0
      %v934 = vmax.f32 %v548, 0.0
      %v935 = vmax.f32 %v659, 0.0
      %v936 = vmax.f32 %v661, 0.0
      %v937 = vmax.f32 %v772, 0.0
      %v938 = vmax.f32 %v774, 0.0
      %v939 = vmax.f32 %v885, 0.0
      %v940 = vmax.f32 %v887, 0.0
      %v941 = vmax.f32 %v552, 0.0
      %v942 = vmax.f32 %v554, 0.0
      %v943 = vmax.f32 %v665, 0.0
      %v944 = vmax.f32 %v667, 0.0
      %v945 = vmax.f32 %v778, 0.0
      %v946 = vmax.f32 %v780, 0.0
      %v947 = vmax.f32 %v891, 0.0
      %v948 = vmax.f32 %v893, 0.0
      %v949 = vmax.f32 %v558, 0.0
      %v950 = vmax.f32 %v560, 0.0
      %v951 = vmax.f32 %v671, 0.0
      %v952 = vmax.f32 %v673, 0.0
      %v953 = vmax.f32 %v784, 0.0
      %v954 = vmax.f32 %v786, 0.0
      %v955 = vmax.f32 %v897, 0.0
      %v956 = vmax.f32 %v899, 0.0
      %v957 = vmax.f32 %v564, 0.0
      %v958 = vmax.f32 %v566, 0.0
      %v959 = vmax.f32 %v677, 0.0
      %v960 = vmax.f32 %v679, 0.0
      %v961 = vmax.f32 %v790, 0.0
      %v962 = vmax.f32 %v792, 0.0
      %v963 = vmax.f32 %v903, 0.0
      %v964 = vmax.f32 %v905, 0.0
      %v965 = vmax.f32 %v570, 0.0
      %v966 = vmax.f32 %v572, 0.0
      %v967 = vmax.f32 %v683, 0.0
      %v968 = vmax.f32 %v685, 0.0
      %v969 = vmax.f32 %v796, 0.0
      %v970 = vmax.f32 %v798, 0.0
      %v971 = vmax.f32 %v909, 0.0
      %v972 = vmax.f32 %v911, 0.0
      %v973 = vmax.f32 %v576, 0.0
      %v974 = vmax.f32 %v578, 0.0
      %v975 = vmax.f32 %v689, 0.0
      %v976 = vmax.f32 %v691, 0.0
      %v977 = vmax.f32 %v802, 0.0
      %v978 = vmax.f32 %v804, 0.0
      %v979 = vmax.f32 %v915, 0.0
      %v980 = vmax.f32 %v917, 0.0
      %v981 = vmax.f32 %v582, 0.0
      %v982 = vmax.f32 %v584, 0.0
      %v983 = vmax.f32 %v695, 0.0
      %v984 = vmax.f32 %v697, 0.0
      %v985 = vmax.f32 %v808, 0.0
      %v986 = vmax.f32 %v810, 0.0
      %v987 = vmax.f32 %v921, 0.0
      %v988 = vmax.f32 %v923, 0.0
      %v989 = vld [vmem:[%s3] sm:$0x7]
      %v990 = vld [vmem:[%s4] sm:$0x7]
      %992 = vset.pattern.permute.xlu0 0
      %993 = vperm.xlu0 %992, %v990
      %v994 = vpop.permute.xlu0 %993
      %vm996 = vcmask 523264
      %v998 = vsel %vm996, %v989, 0
      %1000 = vmatprep.subr.mxu0 %v926
      %1001 = vmatpush1.msra.mxu0 %v925
      %1002 = vmatprep.subr.mxu0 %v934
      %1003 = vmatpush1.msra.mxu0 %v933
      %1004 = vmatprep.subr.mxu0 %v942
      %1005 = vmatpush1.msra.mxu0 %v941
      %1006 = vmatprep.subr.mxu0 %v950
      %1007 = vmatpush1.msra.mxu0 %v949
      %1008 = vmatprep.subr.mxu0 %v958
      %1009 = vmatpush1.msra.mxu0 %v957
      %1010 = vmatprep.subr.mxu0 %v966
      %1011 = vmatpush1.msra.mxu0 %v965
      %1012 = vmatprep.subr.mxu0 %v974
      %1013 = vmatpush1.msra.mxu0 %v973
      %1014 = vmatprep.subr.mxu0 %v982
      %1015 = vmatpush1.msra.mxu0 %v981
      %1016 = vmatprep.subr.mxu0 0.0
      %1017 = vmatpush1.msra.mxu0 0.0
      %1018 = vmatprep.subr.mxu0 0.0
      %1019 = vmatpush1.msra.mxu0 0.0
      %1020 = vmatprep.subr.mxu0 0.0
      %1021 = vmatpush1.msra.mxu0 0.0
      %1022 = vmatprep.subr.mxu0 0.0
      %1023 = vmatpush1.msra.mxu0 0.0
      %1024 = vmatprep.subr.mxu0 0.0
      %1025 = vmatpush1.msra.mxu0 0.0
      %1026 = vmatprep.subr.mxu0 0.0
      %1027 = vmatpush1.msra.mxu0 0.0
      %1028 = vmatprep.subr.mxu0 0.0
      %1029 = vmatpush1.msra.mxu0 0.0
      %1030 = vmatprep.subr.mxu0 0.0
      %1031 = vmatpush1.msra.mxu0 0.0
      %1032 = vmatprep.subr.mxu0 0.0
      %1033 = vmatpush1.msra.mxu0 0.0
      %1034 = vmatprep.subr.mxu0 0.0
      %1035 = vmatpush1.msra.mxu0 0.0
      %1036 = vmatprep.subr.mxu0 0.0
      %1037 = vmatpush1.msra.mxu0 0.0
      %1038 = vmatprep.subr.mxu0 0.0
      %1039 = vmatpush1.msra.mxu0 0.0
      %1040 = vmatprep.subr.mxu0 0.0
      %1041 = vmatpush1.msra.mxu0 0.0
      %1042 = vmatprep.subr.mxu0 0.0
      %1043 = vmatpush1.msra.mxu0 0.0
      %1044 = vmatprep.subr.mxu0 0.0
      %1045 = vmatpush1.msra.mxu0 0.0
      %1046 = vmatprep.subr.mxu0 0.0
      %1047 = vmatpush1.msra.mxu0 0.0
      %1048 = vmatprep.subr.mxu0 0.0
      %1049 = vmatpush1.msra.mxu0 0.0
      %1050 = vmatprep.subr.mxu0 0.0
      %1051 = vmatpush1.msra.mxu0 0.0
      %1052 = vmatprep.subr.mxu0 0.0
      %1053 = vmatpush1.msra.mxu0 0.0
      %1054 = vmatprep.subr.mxu0 0.0
      %1055 = vmatpush1.msra.mxu0 0.0
      %1056 = vmatprep.subr.mxu0 0.0
      %1057 = vmatpush1.msra.mxu0 0.0
      %1058 = vmatprep.subr.mxu0 0.0
      %1059 = vmatpush1.msra.mxu0 0.0
      %1060 = vmatprep.subr.mxu0 0.0
      %1061 = vmatpush1.msra.mxu0 0.0
      %1062 = vmatprep.subr.mxu0 0.0
      %1063 = vmatpush1.msra.mxu0 0.0
      %1064 = vmatprep.mubr.f32.mxu0 0.0
      %1065 = vmatmul.mubr.f32.gmra.mrb[0].mxu0 %v998
      %v1066 = vpop.f32.mrb[0].mxu0
      %v1067 = vadd.f32 %v994, %v1066
      %v1068 = vpop.f32.mrb[0].mxu0
      %v1069 = vadd.f32 %v994, %v1068
      %1070 = vdwg.mxu0
      %1071 = vmatprep.subr.mxu0 %v928
      %1072 = vmatpush1.msra.mxu0 %v927
      %1073 = vmatprep.subr.mxu0 %v936
      %1074 = vmatpush1.msra.mxu0 %v935
      %1075 = vmatprep.subr.mxu0 %v944
      %1076 = vmatpush1.msra.mxu0 %v943
      %1077 = vmatprep.subr.mxu0 %v952
      %1078 = vmatpush1.msra.mxu0 %v951
      %1079 = vmatprep.subr.mxu0 %v960
      %1080 = vmatpush1.msra.mxu0 %v959
      %1081 = vmatprep.subr.mxu0 %v968
      %1082 = vmatpush1.msra.mxu0 %v967
      %1083 = vmatprep.subr.mxu0 %v976
      %1084 = vmatpush1.msra.mxu0 %v975
      %1085 = vmatprep.subr.mxu0 %v984
      %1086 = vmatpush1.msra.mxu0 %v983
      %1087 = vmatprep.subr.mxu0 0.0
      %1088 = vmatpush1.msra.mxu0 0.0
      %1089 = vmatprep.subr.mxu0 0.0
      %1090 = vmatpush1.msra.mxu0 0.0
      %1091 = vmatprep.subr.mxu0 0.0
      %1092 = vmatpush1.msra.mxu0 0.0
      %1093 = vmatprep.subr.mxu0 0.0
      %1094 = vmatpush1.msra.mxu0 0.0
      %1095 = vmatprep.subr.mxu0 0.0
      %1096 = vmatpush1.msra.mxu0 0.0
      %1097 = vmatprep.subr.mxu0 0.0
      %1098 = vmatpush1.msra.mxu0 0.0
      %1099 = vmatprep.subr.mxu0 0.0
      %1100 = vmatpush1.msra.mxu0 0.0
      %1101 = vmatprep.subr.mxu0 0.0
      %1102 = vmatpush1.msra.mxu0 0.0
      %1103 = vmatprep.subr.mxu0 0.0
      %1104 = vmatpush1.msra.mxu0 0.0
      %1105 = vmatprep.subr.mxu0 0.0
      %1106 = vmatpush1.msra.mxu0 0.0
      %1107 = vmatprep.subr.mxu0 0.0
      %1108 = vmatpush1.msra.mxu0 0.0
      %1109 = vmatprep.subr.mxu0 0.0
      %1110 = vmatpush1.msra.mxu0 0.0
      %1111 = vmatprep.subr.mxu0 0.0
      %1112 = vmatpush1.msra.mxu0 0.0
      %1113 = vmatprep.subr.mxu0 0.0
      %1114 = vmatpush1.msra.mxu0 0.0
      %1115 = vmatprep.subr.mxu0 0.0
      %1116 = vmatpush1.msra.mxu0 0.0
      %1117 = vmatprep.subr.mxu0 0.0
      %1118 = vmatpush1.msra.mxu0 0.0
      %1119 = vmatprep.subr.mxu0 0.0
      %1120 = vmatpush1.msra.mxu0 0.0
      %1121 = vmatprep.subr.mxu0 0.0
      %1122 = vmatpush1.msra.mxu0 0.0
      %1123 = vmatprep.subr.mxu0 0.0
      %1124 = vmatpush1.msra.mxu0 0.0
      %1125 = vmatprep.subr.mxu0 0.0
      %1126 = vmatpush1.msra.mxu0 0.0
      %1127 = vmatprep.subr.mxu0 0.0
      %1128 = vmatpush1.msra.mxu0 0.0
      %1129 = vmatprep.subr.mxu0 0.0
      %1130 = vmatpush1.msra.mxu0 0.0
      %1131 = vmatprep.subr.mxu0 0.0
      %1132 = vmatpush1.msra.mxu0 0.0
      %1133 = vmatprep.subr.mxu0 0.0
      %1134 = vmatpush1.msra.mxu0 0.0
      %1135 = vmatprep.mubr.f32.mxu0 0.0
      %1136 = vmatmul.mubr.f32.gmra.mrb[0].mxu0 %v998
      %v1137 = vpop.f32.mrb[0].mxu0
      %v1138 = vadd.f32 %v994, %v1137
      %v1139 = vpop.f32.mrb[0].mxu0
      %v1140 = vadd.f32 %v994, %v1139
      %1141 = vdwg.mxu0
      %1142 = vmatprep.subr.mxu0 %v930
      %1143 = vmatpush1.msra.mxu0 %v929
      %1144 = vmatprep.subr.mxu0 %v938
      %1145 = vmatpush1.msra.mxu0 %v937
      %1146 = vmatprep.subr.mxu0 %v946
      %1147 = vmatpush1.msra.mxu0 %v945
      %1148 = vmatprep.subr.mxu0 %v954
      %1149 = vmatpush1.msra.mxu0 %v953
      %1150 = vmatprep.subr.mxu0 %v962
      %1151 = vmatpush1.msra.mxu0 %v961
      %1152 = vmatprep.subr.mxu0 %v970
      %1153 = vmatpush1.msra.mxu0 %v969
      %1154 = vmatprep.subr.mxu0 %v978
      %1155 = vmatpush1.msra.mxu0 %v977
      %1156 = vmatprep.subr.mxu0 %v986
      %1157 = vmatpush1.msra.mxu0 %v985
      %1158 = vmatprep.subr.mxu0 0.0
      %1159 = vmatpush1.msra.mxu0 0.0
      %1160 = vmatprep.subr.mxu0 0.0
      %1161 = vmatpush1.msra.mxu0 0.0
      %1162 = vmatprep.subr.mxu0 0.0
      %1163 = vmatpush1.msra.mxu0 0.0
      %1164 = vmatprep.subr.mxu0 0.0
      %1165 = vmatpush1.msra.mxu0 0.0
      %1166 = vmatprep.subr.mxu0 0.0
      %1167 = vmatpush1.msra.mxu0 0.0
      %1168 = vmatprep.subr.mxu0 0.0
      %1169 = vmatpush1.msra.mxu0 0.0
      %1170 = vmatprep.subr.mxu0 0.0
      %1171 = vmatpush1.msra.mxu0 0.0
      %1172 = vmatprep.subr.mxu0 0.0
      %1173 = vmatpush1.msra.mxu0 0.0
      %1174 = vmatprep.subr.mxu0 0.0
      %1175 = vmatpush1.msra.mxu0 0.0
      %1176 = vmatprep.subr.mxu0 0.0
      %1177 = vmatpush1.msra.mxu0 0.0
      %1178 = vmatprep.subr.mxu0 0.0
      %1179 = vmatpush1.msra.mxu0 0.0
      %1180 = vmatprep.subr.mxu0 0.0
      %1181 = vmatpush1.msra.mxu0 0.0
      %1182 = vmatprep.subr.mxu0 0.0
      %1183 = vmatpush1.msra.mxu0 0.0
      %1184 = vmatprep.subr.mxu0 0.0
      %1185 = vmatpush1.msra.mxu0 0.0
      %1186 = vmatprep.subr.mxu0 0.0
      %1187 = vmatpush1.msra.mxu0 0.0
      %1188 = vmatprep.subr.mxu0 0.0
      %1189 = vmatpush1.msra.mxu0 0.0
      %1190 = vmatprep.subr.mxu0 0.0
      %1191 = vmatpush1.msra.mxu0 0.0
      %1192 = vmatprep.subr.mxu0 0.0
      %1193 = vmatpush1.msra.mxu0 0.0
      %1194 = vmatprep.subr.mxu0 0.0
      %1195 = vmatpush1.msra.mxu0 0.0
      %1196 = vmatprep.subr.mxu0 0.0
      %1197 = vmatpush1.msra.mxu0 0.0
      %1198 = vmatprep.subr.mxu0 0.0
      %1199 = vmatpush1.msra.mxu0 0.0
      %1200 = vmatprep.subr.mxu0 0.0
      %1201 = vmatpush1.msra.mxu0 0.0
      %1202 = vmatprep.subr.mxu0 0.0
      %1203 = vmatpush1.msra.mxu0 0.0
      %1204 = vmatprep.subr.mxu0 0.0
      %1205 = vmatpush1.msra.mxu0 0.0
      %1206 = vmatprep.mubr.f32.mxu0 0.0
      %1207 = vmatmul.mubr.f32.gmra.mrb[0].mxu0 %v998
      %v1208 = vpop.f32.mrb[0].mxu0
      %v1209 = vadd.f32 %v994, %v1208
      %v1210 = vpop.f32.mrb[0].mxu0
      %v1211 = vadd.f32 %v994, %v1210
      %1212 = vdwg.mxu0
      %1213 = vmatprep.subr.mxu0 %v932
      %1214 = vmatpush1.msra.mxu0 %v931
      %1215 = vmatprep.subr.mxu0 %v940
      %1216 = vmatpush1.msra.mxu0 %v939
      %1217 = vmatprep.subr.mxu0 %v948
      %1218 = vmatpush1.msra.mxu0 %v947
      %1219 = vmatprep.subr.mxu0 %v956
      %1220 = vmatpush1.msra.mxu0 %v955
      %1221 = vmatprep.subr.mxu0 %v964
      %1222 = vmatpush1.msra.mxu0 %v963
      %1223 = vmatprep.subr.mxu0 %v972
      %1224 = vmatpush1.msra.mxu0 %v971
      %1225 = vmatprep.subr.mxu0 %v980
      %1226 = vmatpush1.msra.mxu0 %v979
      %1227 = vmatprep.subr.mxu0 %v988
      %1228 = vmatpush1.msra.mxu0 %v987
      %1229 = vmatprep.subr.mxu0 0.0
      %1230 = vmatpush1.msra.mxu0 0.0
      %1231 = vmatprep.subr.mxu0 0.0
      %1232 = vmatpush1.msra.mxu0 0.0
      %1233 = vmatprep.subr.mxu0 0.0
      %1234 = vmatpush1.msra.mxu0 0.0
      %1235 = vmatprep.subr.mxu0 0.0
      %1236 = vmatpush1.msra.mxu0 0.0
      %1237 = vmatprep.subr.mxu0 0.0
      %1238 = vmatpush1.msra.mxu0 0.0
      %1239 = vmatprep.subr.mxu0 0.0
      %1240 = vmatpush1.msra.mxu0 0.0
      %1241 = vmatprep.subr.mxu0 0.0
      %1242 = vmatpush1.msra.mxu0 0.0
      %1243 = vmatprep.subr.mxu0 0.0
      %1244 = vmatpush1.msra.mxu0 0.0
      %1245 = vmatprep.subr.mxu0 0.0
      %1246 = vmatpush1.msra.mxu0 0.0
      %1247 = vmatprep.subr.mxu0 0.0
      %1248 = vmatpush1.msra.mxu0 0.0
      %1249 = vmatprep.subr.mxu0 0.0
      %1250 = vmatpush1.msra.mxu0 0.0
      %1251 = vmatprep.subr.mxu0 0.0
      %1252 = vmatpush1.msra.mxu0 0.0
      %1253 = vmatprep.subr.mxu0 0.0
      %1254 = vmatpush1.msra.mxu0 0.0
      %1255 = vmatprep.subr.mxu0 0.0
      %1256 = vmatpush1.msra.mxu0 0.0
      %1257 = vmatprep.subr.mxu0 0.0
      %1258 = vmatpush1.msra.mxu0 0.0
      %1259 = vmatprep.subr.mxu0 0.0
      %1260 = vmatpush1.msra.mxu0 0.0
      %1261 = vmatprep.subr.mxu0 0.0
      %1262 = vmatpush1.msra.mxu0 0.0
      %1263 = vmatprep.subr.mxu0 0.0
      %1264 = vmatpush1.msra.mxu0 0.0
      %1265 = vmatprep.subr.mxu0 0.0
      %1266 = vmatpush1.msra.mxu0 0.0
      %1267 = vmatprep.subr.mxu0 0.0
      %1268 = vmatpush1.msra.mxu0 0.0
      %1269 = vmatprep.subr.mxu0 0.0
      %1270 = vmatpush1.msra.mxu0 0.0
      %1271 = vmatprep.subr.mxu0 0.0
      %1272 = vmatpush1.msra.mxu0 0.0
      %1273 = vmatprep.subr.mxu0 0.0
      %1274 = vmatpush1.msra.mxu0 0.0
      %1275 = vmatprep.subr.mxu0 0.0
      %1276 = vmatpush1.msra.mxu0 0.0
      %1277 = vmatprep.mubr.f32.mxu0 0.0
      %1278 = vmatmul.mubr.f32.gmra.mrb[0].mxu0 %v998
      %v1279 = vpop.f32.mrb[0].mxu0
      %v1280 = vadd.f32 %v994, %v1279
      %v1281 = vpop.f32.mrb[0].mxu0
      %v1282 = vadd.f32 %v994, %v1281
      %1283 = vdwg.mxu0
      %v1284 = vld [vmem:[%s9 + $0x40] sm:$0x77]
      %v1285 = vld [vmem:[%s9 + $0x48] sm:$0x77]
      %v1286 = vld [vmem:[%s9 + $0x50] sm:$0x77]
      %v1287 = vld [vmem:[%s9 + $0x58] sm:$0x77]
      %v1296 = vcombine.low %v1067, %v1069
      %v1297 = vcombine.low %v1138, %v1140
      %v1298 = vcombine.low %v1209, %v1211
      %v1299 = vcombine.low %v1280, %v1282
      %v1304 = vmul.f32 %v1284, %v1296
      %v1305 = vmul.f32 %v1285, %v1297
      %v1306 = vmul.f32 %v1286, %v1298
      %v1307 = vmul.f32 %v1287, %v1299
      %v1308 = vld [vmem:[%s9 + $0x60] sm:$0x77]
      %v1309 = vld [vmem:[%s9 + $0x68] sm:$0x77]
      %v1310 = vld [vmem:[%s9 + $0x70] sm:$0x77]
      %v1311 = vld [vmem:[%s9 + $0x78] sm:$0x77]
      %1312 = vrot.lane.b32.xlu0 %v1067, 127
      %v1313 = vpop.permute.xlu0 %1312
      %1314 = vrot.lane.b32.xlu0 %v1069, 127
      %v1315 = vpop.permute.xlu0 %1314
      %1316 = vrot.lane.b32.xlu0 %v1138, 127
      %v1317 = vpop.permute.xlu0 %1316
      %1318 = vrot.lane.b32.xlu0 %v1140, 127
      %v1319 = vpop.permute.xlu0 %1318
      %1320 = vrot.lane.b32.xlu0 %v1209, 127
      %v1321 = vpop.permute.xlu0 %1320
      %1322 = vrot.lane.b32.xlu0 %v1211, 127
      %v1323 = vpop.permute.xlu0 %1322
      %1324 = vrot.lane.b32.xlu0 %v1280, 127
      %v1325 = vpop.permute.xlu0 %1324
      %1326 = vrot.lane.b32.xlu0 %v1282, 127
      %v1327 = vpop.permute.xlu0 %1326
      %v1328 = vlaneseq
      %v1329 = vand.u32 %v1328, 127
      %vm1330 = vcmp.lt.s32.totalorder %v1329, 127
      %v1331 = vsel %vm1330, %v1325, %v1327
      %v1332 = vsel %vm1330, %v1323, %v1325
      %v1333 = vsel %vm1330, %v1321, %v1323
      %v1334 = vsel %vm1330, %v1319, %v1321
      %v1335 = vsel %vm1330, %v1317, %v1319
      %v1336 = vsel %vm1330, %v1315, %v1317
      %v1337 = vsel %vm1330, %v1313, %v1315
      %v1338 = vsel %vm1330, %v1327, %v1313
      %v1347 = vcombine.low %v1337, %v1336
      %v1348 = vcombine.low %v1335, %v1334
      %v1349 = vcombine.low %v1333, %v1332
      %v1350 = vcombine.low %v1331, %v1338
      %v1355 = vmul.f32 %v1308, %v1347
      %v1356 = vmul.f32 %v1309, %v1348
      %v1357 = vmul.f32 %v1310, %v1349
      %v1358 = vmul.f32 %v1311, %v1350
      %v1359 = vadd.f32 %v1304, %v1355
      %v1360 = vadd.f32 %v1305, %v1356
      %v1361 = vadd.f32 %v1306, %v1357
      %v1362 = vadd.f32 %v1307, %v1358
      %v1363 = vld [vmem:[%s9 + $0x20] sm:$0x77]
      %v1364 = vld [vmem:[%s9 + $0x28] sm:$0x77]
      %v1365 = vld [vmem:[%s9 + $0x30] sm:$0x77]
      %v1366 = vld [vmem:[%s9 + $0x38] sm:$0x77]
      %1367 = vrot.lane.b32.xlu0 %v1067, 1
      %v1368 = vpop.permute.xlu0 %1367
      %1369 = vrot.lane.b32.xlu0 %v1069, 1
      %v1370 = vpop.permute.xlu0 %1369
      %1371 = vrot.lane.b32.xlu0 %v1138, 1
      %v1372 = vpop.permute.xlu0 %1371
      %1373 = vrot.lane.b32.xlu0 %v1140, 1
      %v1374 = vpop.permute.xlu0 %1373
      %1375 = vrot.lane.b32.xlu0 %v1209, 1
      %v1376 = vpop.permute.xlu0 %1375
      %1377 = vrot.lane.b32.xlu0 %v1211, 1
      %v1378 = vpop.permute.xlu0 %1377
      %1379 = vrot.lane.b32.xlu0 %v1280, 1
      %v1380 = vpop.permute.xlu0 %1379
      %1381 = vrot.lane.b32.xlu0 %v1282, 1
      %v1382 = vpop.permute.xlu0 %1381
      %vm1383 = vcmp.lt.s32.totalorder %v1329, 1
      %v1384 = vsel %vm1383, %v1380, %v1382
      %v1385 = vsel %vm1383, %v1378, %v1380
      %v1386 = vsel %vm1383, %v1376, %v1378
      %v1387 = vsel %vm1383, %v1374, %v1376
      %v1388 = vsel %vm1383, %v1372, %v1374
      %v1389 = vsel %vm1383, %v1370, %v1372
      %v1390 = vsel %vm1383, %v1368, %v1370
      %v1391 = vsel %vm1383, %v1382, %v1368
      %v1400 = vcombine.low %v1391, %v1390
      %v1401 = vcombine.low %v1389, %v1388
      %v1402 = vcombine.low %v1387, %v1386
      %v1403 = vcombine.low %v1385, %v1384
      %v1408 = vmul.f32 %v1363, %v1400
      %v1409 = vmul.f32 %v1364, %v1401
      %v1410 = vmul.f32 %v1365, %v1402
      %v1411 = vmul.f32 %v1366, %v1403
      %v1412 = vadd.f32 %v1359, %v1408
      %v1413 = vadd.f32 %v1360, %v1409
      %v1414 = vadd.f32 %v1361, %v1410
      %v1415 = vadd.f32 %v1362, %v1411
      %v1416 = vld [vmem:[%s9 + $0xa0] sm:$0x77]
      %v1417 = vld [vmem:[%s9 + $0xa8] sm:$0x77]
      %v1418 = vld [vmem:[%s9 + $0xb0] sm:$0x77]
      %v1419 = vld [vmem:[%s9 + $0xb8] sm:$0x77]
      %v1420 = vmul.f32 %v1416, %v1347
      %v1421 = vmul.f32 %v1417, %v1348
      %v1422 = vmul.f32 %v1418, %v1349
      %v1423 = vmul.f32 %v1419, %v1350
      %v1424 = vld [vmem:[%s9 + $0xe0] sm:$0x77]
      %v1425 = vld [vmem:[%s9 + $0xe8] sm:$0x77]
      %v1426 = vld [vmem:[%s9 + $0xf0] sm:$0x77]
      %v1427 = vld [vmem:[%s9 + $0xf8] sm:$0x77]
      %v1428 = vmul.f32 %v1424, %v1400
      %v1429 = vmul.f32 %v1425, %v1401
      %v1430 = vmul.f32 %v1426, %v1402
      %v1431 = vmul.f32 %v1427, %v1403
      %v1432 = vld [vmem:[%s9 + $0x80] sm:$0x77]
      %v1433 = vld [vmem:[%s9 + $0x88] sm:$0x77]
      %v1434 = vld [vmem:[%s9 + $0x90] sm:$0x77]
      %v1435 = vld [vmem:[%s9 + $0x98] sm:$0x77]
      %1436 = vrot.lane.b32.xlu0 %v1067, 126
      %v1437 = vpop.permute.xlu0 %1436
      %1438 = vrot.lane.b32.xlu0 %v1069, 126
      %v1439 = vpop.permute.xlu0 %1438
      %1440 = vrot.lane.b32.xlu0 %v1138, 126
      %v1441 = vpop.permute.xlu0 %1440
      %1442 = vrot.lane.b32.xlu0 %v1140, 126
      %v1443 = vpop.permute.xlu0 %1442
      %1444 = vrot.lane.b32.xlu0 %v1209, 126
      %v1445 = vpop.permute.xlu0 %1444
      %1446 = vrot.lane.b32.xlu0 %v1211, 126
      %v1447 = vpop.permute.xlu0 %1446
      %1448 = vrot.lane.b32.xlu0 %v1280, 126
      %v1449 = vpop.permute.xlu0 %1448
      %1450 = vrot.lane.b32.xlu0 %v1282, 126
      %v1451 = vpop.permute.xlu0 %1450
      %vm1452 = vcmp.lt.s32.totalorder %v1329, 126
      %v1453 = vsel %vm1452, %v1449, %v1451
      %v1454 = vsel %vm1452, %v1447, %v1449
      %v1455 = vsel %vm1452, %v1445, %v1447
      %v1456 = vsel %vm1452, %v1443, %v1445
      %v1457 = vsel %vm1452, %v1441, %v1443
      %v1458 = vsel %vm1452, %v1439, %v1441
      %v1459 = vsel %vm1452, %v1437, %v1439
      %v1460 = vsel %vm1452, %v1451, %v1437
      %v1469 = vcombine.low %v1459, %v1458
      %v1470 = vcombine.low %v1457, %v1456
      %v1471 = vcombine.low %v1455, %v1454
      %v1472 = vcombine.low %v1453, %v1460
      %v1477 = vmul.f32 %v1432, %v1469
      %v1478 = vmul.f32 %v1433, %v1470
      %v1479 = vmul.f32 %v1434, %v1471
      %v1480 = vmul.f32 %v1435, %v1472
      %v1481 = vadd.f32 %v1412, %v1477
      %v1482 = vadd.f32 %v1413, %v1478
      %v1483 = vadd.f32 %v1414, %v1479
      %v1484 = vadd.f32 %v1415, %v1480
      %v1485 = vld [vmem:[%s9] sm:$0x77]
      %v1486 = vld [vmem:[%s9 + $0x8] sm:$0x77]
      %v1487 = vld [vmem:[%s9 + $0x10] sm:$0x77]
      %v1488 = vld [vmem:[%s9 + $0x18] sm:$0x77]
      %1489 = vrot.lane.b32.xlu0 %v1067, 2
      %v1490 = vpop.permute.xlu0 %1489
      %1491 = vrot.lane.b32.xlu0 %v1069, 2
      %v1492 = vpop.permute.xlu0 %1491
      %1493 = vrot.lane.b32.xlu0 %v1138, 2
      %v1494 = vpop.permute.xlu0 %1493
      %1495 = vrot.lane.b32.xlu0 %v1140, 2
      %v1496 = vpop.permute.xlu0 %1495
      %1497 = vrot.lane.b32.xlu0 %v1209, 2
      %v1498 = vpop.permute.xlu0 %1497
      %1499 = vrot.lane.b32.xlu0 %v1211, 2
      %v1500 = vpop.permute.xlu0 %1499
      %1501 = vrot.lane.b32.xlu0 %v1280, 2
      %v1502 = vpop.permute.xlu0 %1501
      %1503 = vrot.lane.b32.xlu0 %v1282, 2
      %v1504 = vpop.permute.xlu0 %1503
      %vm1505 = vcmp.lt.s32.totalorder %v1329, 2
      %v1506 = vsel %vm1505, %v1502, %v1504
      %v1507 = vsel %vm1505, %v1500, %v1502
      %v1508 = vsel %vm1505, %v1498, %v1500
      %v1509 = vsel %vm1505, %v1496, %v1498
      %v1510 = vsel %vm1505, %v1494, %v1496
      %v1511 = vsel %vm1505, %v1492, %v1494
      %v1512 = vsel %vm1505, %v1490, %v1492
      %v1513 = vsel %vm1505, %v1504, %v1490
      %v1522 = vcombine.low %v1513, %v1512
      %v1523 = vcombine.low %v1511, %v1510
      %v1524 = vcombine.low %v1509, %v1508
      %v1525 = vcombine.low %v1507, %v1506
      %v1530 = vmul.f32 %v1485, %v1522
      %v1531 = vmul.f32 %v1486, %v1523
      %v1532 = vmul.f32 %v1487, %v1524
      %v1533 = vmul.f32 %v1488, %v1525
      %v1534 = vadd.f32 %v1481, %v1530
      %v1535 = vadd.f32 %v1482, %v1531
      %v1536 = vadd.f32 %v1483, %v1532
      %v1537 = vadd.f32 %v1484, %v1533
      %v1538 = vld [vmem:[%s9 + $0xc0] sm:$0x77]
      %v1539 = vld [vmem:[%s9 + $0xc8] sm:$0x77]
      %v1540 = vld [vmem:[%s9 + $0xd0] sm:$0x77]
      %v1541 = vld [vmem:[%s9 + $0xd8] sm:$0x77]
      %v1542 = vmul.f32 %v1538, %v1469
      %v1543 = vmul.f32 %v1539, %v1470
      %v1544 = vmul.f32 %v1540, %v1471
      %v1545 = vmul.f32 %v1541, %v1472
      %v1546 = vadd.f32 %v1420, %v1542
      %v1547 = vadd.f32 %v1421, %v1543
      %v1548 = vadd.f32 %v1422, %v1544
      %v1549 = vadd.f32 %v1423, %v1545
      %v1550 = vld [vmem:[%s9 + $0x100] sm:$0x77]
      %v1551 = vld [vmem:[%s9 + $0x108] sm:$0x77]
      %v1552 = vld [vmem:[%s9 + $0x110] sm:$0x77]
      %v1553 = vld [vmem:[%s9 + $0x118] sm:$0x77]
      %v1554 = vmul.f32 %v1550, %v1522
      %v1555 = vmul.f32 %v1551, %v1523
      %v1556 = vmul.f32 %v1552, %v1524
      %v1557 = vmul.f32 %v1553, %v1525
      %v1558 = vadd.f32 %v1428, %v1554
      %v1559 = vadd.f32 %v1429, %v1555
      %v1560 = vadd.f32 %v1430, %v1556
      %v1561 = vadd.f32 %v1431, %v1557
      %v1562 = vld [vmem:[%s5] sm:$0x7]
      %v1563 = vld [vmem:[%s8] sm:$0x7]
      %1565 = vset.pattern.permute.xlu0 0
      %1566 = vperm.xlu0 %1565, %v1563
      %v1567 = vpop.permute.xlu0 %1566
      %v1573 = vcombine.high %v1534, %v1534
      %v1574 = vcombine.high %v1535, %v1535
      %v1575 = vcombine.high %v1536, %v1536
      %v1576 = vcombine.high %v1537, %v1537
      %v1578 = vsel %vm431, %v1562, 0
      %v1580 = vsel %vm456, %v1534, 0
      %v1582 = vsel %vm456, %v1573, 0
      %v1584 = vsel %vm456, %v1535, 0
      %v1586 = vsel %vm456, %v1574, 0
      %v1588 = vsel %vm456, %v1536, 0
      %v1590 = vsel %vm456, %v1575, 0
      %v1592 = vsel %vm456, %v1537, 0
      %v1594 = vsel %vm456, %v1576, 0
      %1596 = vmatprep.subr.mxu0 %v1582
      %1597 = vmatpush1.msra.mxu0 %v1580
      %1598 = vmatprep.subr.mxu0 0.0
      %1599 = vmatpush1.msra.mxu0 0.0
      %1600 = vmatprep.subr.mxu0 0.0
      %1601 = vmatpush1.msra.mxu0 0.0
      %1602 = vmatprep.subr.mxu0 0.0
      %1603 = vmatpush1.msra.mxu0 0.0
      %1604 = vmatprep.subr.mxu0 0.0
      %1605 = vmatpush1.msra.mxu0 0.0
      %1606 = vmatprep.subr.mxu0 0.0
      %1607 = vmatpush1.msra.mxu0 0.0
      %1608 = vmatprep.subr.mxu0 0.0
      %1609 = vmatpush1.msra.mxu0 0.0
      %1610 = vmatprep.subr.mxu0 0.0
      %1611 = vmatpush1.msra.mxu0 0.0
      %1612 = vmatprep.subr.mxu0 0.0
      %1613 = vmatpush1.msra.mxu0 0.0
      %1614 = vmatprep.subr.mxu0 0.0
      %1615 = vmatpush1.msra.mxu0 0.0
      %1616 = vmatprep.subr.mxu0 0.0
      %1617 = vmatpush1.msra.mxu0 0.0
      %1618 = vmatprep.subr.mxu0 0.0
      %1619 = vmatpush1.msra.mxu0 0.0
      %1620 = vmatprep.subr.mxu0 0.0
      %1621 = vmatpush1.msra.mxu0 0.0
      %1622 = vmatprep.subr.mxu0 0.0
      %1623 = vmatpush1.msra.mxu0 0.0
      %1624 = vmatprep.subr.mxu0 0.0
      %1625 = vmatpush1.msra.mxu0 0.0
      %1626 = vmatprep.subr.mxu0 0.0
      %1627 = vmatpush1.msra.mxu0 0.0
      %1628 = vmatprep.subr.mxu0 0.0
      %1629 = vmatpush1.msra.mxu0 0.0
      %1630 = vmatprep.subr.mxu0 0.0
      %1631 = vmatpush1.msra.mxu0 0.0
      %1632 = vmatprep.subr.mxu0 0.0
      %1633 = vmatpush1.msra.mxu0 0.0
      %1634 = vmatprep.subr.mxu0 0.0
      %1635 = vmatpush1.msra.mxu0 0.0
      %1636 = vmatprep.subr.mxu0 0.0
      %1637 = vmatpush1.msra.mxu0 0.0
      %1638 = vmatprep.subr.mxu0 0.0
      %1639 = vmatpush1.msra.mxu0 0.0
      %1640 = vmatprep.subr.mxu0 0.0
      %1641 = vmatpush1.msra.mxu0 0.0
      %1642 = vmatprep.subr.mxu0 0.0
      %1643 = vmatpush1.msra.mxu0 0.0
      %1644 = vmatprep.subr.mxu0 0.0
      %1645 = vmatpush1.msra.mxu0 0.0
      %1646 = vmatprep.subr.mxu0 0.0
      %1647 = vmatpush1.msra.mxu0 0.0
      %1648 = vmatprep.subr.mxu0 0.0
      %1649 = vmatpush1.msra.mxu0 0.0
      %1650 = vmatprep.subr.mxu0 0.0
      %1651 = vmatpush1.msra.mxu0 0.0
      %1652 = vmatprep.subr.mxu0 0.0
      %1653 = vmatpush1.msra.mxu0 0.0
      %1654 = vmatprep.subr.mxu0 0.0
      %1655 = vmatpush1.msra.mxu0 0.0
      %1656 = vmatprep.subr.mxu0 0.0
      %1657 = vmatpush1.msra.mxu0 0.0
      %1658 = vmatprep.subr.mxu0 0.0
      %1659 = vmatpush1.msra.mxu0 0.0
      %1660 = vmatprep.mubr.f32.mxu0 0.0
      %1661 = vmatmul.mubr.f32.gmra.mrb[0].mxu0 %v1578
      %v1662 = vpop.f32.mrb[0].mxu0
      %v1663 = vadd.f32 %v1567, %v1662
      %v1664 = vpop.f32.mrb[0].mxu0
      %v1665 = vadd.f32 %v1567, %v1664
      %1666 = vdwg.mxu0
      %1667 = vmatprep.subr.mxu0 %v1586
      %1668 = vmatpush1.msra.mxu0 %v1584
      %1669 = vmatprep.subr.mxu0 0.0
      %1670 = vmatpush1.msra.mxu0 0.0
      %1671 = vmatprep.subr.mxu0 0.0
      %1672 = vmatpush1.msra.mxu0 0.0
      %1673 = vmatprep.subr.mxu0 0.0
      %1674 = vmatpush1.msra.mxu0 0.0
      %1675 = vmatprep.subr.mxu0 0.0
      %1676 = vmatpush1.msra.mxu0 0.0
      %1677 = vmatprep.subr.mxu0 0.0
      %1678 = vmatpush1.msra.mxu0 0.0
      %1679 = vmatprep.subr.mxu0 0.0
      %1680 = vmatpush1.msra.mxu0 0.0
      %1681 = vmatprep.subr.mxu0 0.0
      %1682 = vmatpush1.msra.mxu0 0.0
      %1683 = vmatprep.subr.mxu0 0.0
      %1684 = vmatpush1.msra.mxu0 0.0
      %1685 = vmatprep.subr.mxu0 0.0
      %1686 = vmatpush1.msra.mxu0 0.0
      %1687 = vmatprep.subr.mxu0 0.0
      %1688 = vmatpush1.msra.mxu0 0.0
      %1689 = vmatprep.subr.mxu0 0.0
      %1690 = vmatpush1.msra.mxu0 0.0
      %1691 = vmatprep.subr.mxu0 0.0
      %1692 = vmatpush1.msra.mxu0 0.0
      %1693 = vmatprep.subr.mxu0 0.0
      %1694 = vmatpush1.msra.mxu0 0.0
      %1695 = vmatprep.subr.mxu0 0.0
      %1696 = vmatpush1.msra.mxu0 0.0
      %1697 = vmatprep.subr.mxu0 0.0
      %1698 = vmatpush1.msra.mxu0 0.0
      %1699 = vmatprep.subr.mxu0 0.0
      %1700 = vmatpush1.msra.mxu0 0.0
      %1701 = vmatprep.subr.mxu0 0.0
      %1702 = vmatpush1.msra.mxu0 0.0
      %1703 = vmatprep.subr.mxu0 0.0
      %1704 = vmatpush1.msra.mxu0 0.0
      %1705 = vmatprep.subr.mxu0 0.0
      %1706 = vmatpush1.msra.mxu0 0.0
      %1707 = vmatprep.subr.mxu0 0.0
      %1708 = vmatpush1.msra.mxu0 0.0
      %1709 = vmatprep.subr.mxu0 0.0
      %1710 = vmatpush1.msra.mxu0 0.0
      %1711 = vmatprep.subr.mxu0 0.0
      %1712 = vmatpush1.msra.mxu0 0.0
      %1713 = vmatprep.subr.mxu0 0.0
      %1714 = vmatpush1.msra.mxu0 0.0
      %1715 = vmatprep.subr.mxu0 0.0
      %1716 = vmatpush1.msra.mxu0 0.0
      %1717 = vmatprep.subr.mxu0 0.0
      %1718 = vmatpush1.msra.mxu0 0.0
      %1719 = vmatprep.subr.mxu0 0.0
      %1720 = vmatpush1.msra.mxu0 0.0
      %1721 = vmatprep.subr.mxu0 0.0
      %1722 = vmatpush1.msra.mxu0 0.0
      %1723 = vmatprep.subr.mxu0 0.0
      %1724 = vmatpush1.msra.mxu0 0.0
      %1725 = vmatprep.subr.mxu0 0.0
      %1726 = vmatpush1.msra.mxu0 0.0
      %1727 = vmatprep.subr.mxu0 0.0
      %1728 = vmatpush1.msra.mxu0 0.0
      %1729 = vmatprep.subr.mxu0 0.0
      %1730 = vmatpush1.msra.mxu0 0.0
      %1731 = vmatprep.mubr.f32.mxu0 0.0
      %1732 = vmatmul.mubr.f32.gmra.mrb[0].mxu0 %v1578
      %v1733 = vpop.f32.mrb[0].mxu0
      %v1734 = vadd.f32 %v1567, %v1733
      %v1735 = vpop.f32.mrb[0].mxu0
      %v1736 = vadd.f32 %v1567, %v1735
      %1737 = vdwg.mxu0
      %1738 = vmatprep.subr.mxu0 %v1590
      %1739 = vmatpush1.msra.mxu0 %v1588
      %1740 = vmatprep.subr.mxu0 0.0
      %1741 = vmatpush1.msra.mxu0 0.0
      %1742 = vmatprep.subr.mxu0 0.0
      %1743 = vmatpush1.msra.mxu0 0.0
      %1744 = vmatprep.subr.mxu0 0.0
      %1745 = vmatpush1.msra.mxu0 0.0
      %1746 = vmatprep.subr.mxu0 0.0
      %1747 = vmatpush1.msra.mxu0 0.0
      %1748 = vmatprep.subr.mxu0 0.0
      %1749 = vmatpush1.msra.mxu0 0.0
      %1750 = vmatprep.subr.mxu0 0.0
      %1751 = vmatpush1.msra.mxu0 0.0
      %1752 = vmatprep.subr.mxu0 0.0
      %1753 = vmatpush1.msra.mxu0 0.0
      %1754 = vmatprep.subr.mxu0 0.0
      %1755 = vmatpush1.msra.mxu0 0.0
      %1756 = vmatprep.subr.mxu0 0.0
      %1757 = vmatpush1.msra.mxu0 0.0
      %1758 = vmatprep.subr.mxu0 0.0
      %1759 = vmatpush1.msra.mxu0 0.0
      %1760 = vmatprep.subr.mxu0 0.0
      %1761 = vmatpush1.msra.mxu0 0.0
      %1762 = vmatprep.subr.mxu0 0.0
      %1763 = vmatpush1.msra.mxu0 0.0
      %1764 = vmatprep.subr.mxu0 0.0
      %1765 = vmatpush1.msra.mxu0 0.0
      %1766 = vmatprep.subr.mxu0 0.0
      %1767 = vmatpush1.msra.mxu0 0.0
      %1768 = vmatprep.subr.mxu0 0.0
      %1769 = vmatpush1.msra.mxu0 0.0
      %1770 = vmatprep.subr.mxu0 0.0
      %1771 = vmatpush1.msra.mxu0 0.0
      %1772 = vmatprep.subr.mxu0 0.0
      %1773 = vmatpush1.msra.mxu0 0.0
      %1774 = vmatprep.subr.mxu0 0.0
      %1775 = vmatpush1.msra.mxu0 0.0
      %1776 = vmatprep.subr.mxu0 0.0
      %1777 = vmatpush1.msra.mxu0 0.0
      %1778 = vmatprep.subr.mxu0 0.0
      %1779 = vmatpush1.msra.mxu0 0.0
      %1780 = vmatprep.subr.mxu0 0.0
      %1781 = vmatpush1.msra.mxu0 0.0
      %1782 = vmatprep.subr.mxu0 0.0
      %1783 = vmatpush1.msra.mxu0 0.0
      %1784 = vmatprep.subr.mxu0 0.0
      %1785 = vmatpush1.msra.mxu0 0.0
      %1786 = vmatprep.subr.mxu0 0.0
      %1787 = vmatpush1.msra.mxu0 0.0
      %1788 = vmatprep.subr.mxu0 0.0
      %1789 = vmatpush1.msra.mxu0 0.0
      %1790 = vmatprep.subr.mxu0 0.0
      %1791 = vmatpush1.msra.mxu0 0.0
      %1792 = vmatprep.subr.mxu0 0.0
      %1793 = vmatpush1.msra.mxu0 0.0
      %1794 = vmatprep.subr.mxu0 0.0
      %1795 = vmatpush1.msra.mxu0 0.0
      %1796 = vmatprep.subr.mxu0 0.0
      %1797 = vmatpush1.msra.mxu0 0.0
      %1798 = vmatprep.subr.mxu0 0.0
      %1799 = vmatpush1.msra.mxu0 0.0
      %1800 = vmatprep.subr.mxu0 0.0
      %1801 = vmatpush1.msra.mxu0 0.0
      %1802 = vmatprep.mubr.f32.mxu0 0.0
      %1803 = vmatmul.mubr.f32.gmra.mrb[0].mxu0 %v1578
      %v1804 = vpop.f32.mrb[0].mxu0
      %v1805 = vadd.f32 %v1567, %v1804
      %v1806 = vpop.f32.mrb[0].mxu0
      %v1807 = vadd.f32 %v1567, %v1806
      %1808 = vdwg.mxu0
      %1809 = vmatprep.subr.mxu0 %v1594
      %1810 = vmatpush1.msra.mxu0 %v1592
      %1811 = vmatprep.subr.mxu0 0.0
      %1812 = vmatpush1.msra.mxu0 0.0
      %1813 = vmatprep.subr.mxu0 0.0
      %1814 = vmatpush1.msra.mxu0 0.0
      %1815 = vmatprep.subr.mxu0 0.0
      %1816 = vmatpush1.msra.mxu0 0.0
      %1817 = vmatprep.subr.mxu0 0.0
      %1818 = vmatpush1.msra.mxu0 0.0
      %1819 = vmatprep.subr.mxu0 0.0
      %1820 = vmatpush1.msra.mxu0 0.0
      %1821 = vmatprep.subr.mxu0 0.0
      %1822 = vmatpush1.msra.mxu0 0.0
      %1823 = vmatprep.subr.mxu0 0.0
      %1824 = vmatpush1.msra.mxu0 0.0
      %1825 = vmatprep.subr.mxu0 0.0
      %1826 = vmatpush1.msra.mxu0 0.0
      %1827 = vmatprep.subr.mxu0 0.0
      %1828 = vmatpush1.msra.mxu0 0.0
      %1829 = vmatprep.subr.mxu0 0.0
      %1830 = vmatpush1.msra.mxu0 0.0
      %1831 = vmatprep.subr.mxu0 0.0
      %1832 = vmatpush1.msra.mxu0 0.0
      %1833 = vmatprep.subr.mxu0 0.0
      %1834 = vmatpush1.msra.mxu0 0.0
      %1835 = vmatprep.subr.mxu0 0.0
      %1836 = vmatpush1.msra.mxu0 0.0
      %1837 = vmatprep.subr.mxu0 0.0
      %1838 = vmatpush1.msra.mxu0 0.0
      %1839 = vmatprep.subr.mxu0 0.0
      %1840 = vmatpush1.msra.mxu0 0.0
      %1841 = vmatprep.subr.mxu0 0.0
      %1842 = vmatpush1.msra.mxu0 0.0
      %1843 = vmatprep.subr.mxu0 0.0
      %1844 = vmatpush1.msra.mxu0 0.0
      %1845 = vmatprep.subr.mxu0 0.0
      %1846 = vmatpush1.msra.mxu0 0.0
      %1847 = vmatprep.subr.mxu0 0.0
      %1848 = vmatpush1.msra.mxu0 0.0
      %1849 = vmatprep.subr.mxu0 0.0
      %1850 = vmatpush1.msra.mxu0 0.0
      %1851 = vmatprep.subr.mxu0 0.0
      %1852 = vmatpush1.msra.mxu0 0.0
      %1853 = vmatprep.subr.mxu0 0.0
      %1854 = vmatpush1.msra.mxu0 0.0
      %1855 = vmatprep.subr.mxu0 0.0
      %1856 = vmatpush1.msra.mxu0 0.0
      %1857 = vmatprep.subr.mxu0 0.0
      %1858 = vmatpush1.msra.mxu0 0.0
      %1859 = vmatprep.subr.mxu0 0.0
      %1860 = vmatpush1.msra.mxu0 0.0
      %1861 = vmatprep.subr.mxu0 0.0
      %1862 = vmatpush1.msra.mxu0 0.0
      %1863 = vmatprep.subr.mxu0 0.0
      %1864 = vmatpush1.msra.mxu0 0.0
      %1865 = vmatprep.subr.mxu0 0.0
      %1866 = vmatpush1.msra.mxu0 0.0
      %1867 = vmatprep.subr.mxu0 0.0
      %1868 = vmatpush1.msra.mxu0 0.0
      %1869 = vmatprep.subr.mxu0 0.0
      %1870 = vmatpush1.msra.mxu0 0.0
      %1871 = vmatprep.subr.mxu0 0.0
      %1872 = vmatpush1.msra.mxu0 0.0
      %1873 = vmatprep.mubr.f32.mxu0 0.0
      %1874 = vmatmul.mubr.f32.gmra.mrb[0].mxu0 %v1578
      %v1875 = vpop.f32.mrb[0].mxu0
      %v1876 = vadd.f32 %v1567, %v1875
      %v1877 = vpop.f32.mrb[0].mxu0
      %v1878 = vadd.f32 %v1567, %v1877
      %1879 = vdwg.mxu0
      %v1880 = vld [vmem:[%s6] sm:$0x7]
      %v1885 = vcombine.high %v1546, %v1546
      %v1886 = vcombine.high %v1547, %v1547
      %v1887 = vcombine.high %v1548, %v1548
      %v1888 = vcombine.high %v1549, %v1549
      %v1890 = vsel %vm431, %v1880, 0
      %v1892 = vsel %vm456, %v1546, 0
      %v1894 = vsel %vm456, %v1885, 0
      %v1896 = vsel %vm456, %v1547, 0
      %v1898 = vsel %vm456, %v1886, 0
      %v1900 = vsel %vm456, %v1548, 0
      %v1902 = vsel %vm456, %v1887, 0
      %v1904 = vsel %vm456, %v1549, 0
      %v1906 = vsel %vm456, %v1888, 0
      %1908 = vmatprep.subr.mxu0 %v1894
      %1909 = vmatpush1.msra.mxu0 %v1892
      %1910 = vmatprep.subr.mxu0 0.0
      %1911 = vmatpush1.msra.mxu0 0.0
      %1912 = vmatprep.subr.mxu0 0.0
      %1913 = vmatpush1.msra.mxu0 0.0
      %1914 = vmatprep.subr.mxu0 0.0
      %1915 = vmatpush1.msra.mxu0 0.0
      %1916 = vmatprep.subr.mxu0 0.0
      %1917 = vmatpush1.msra.mxu0 0.0
      %1918 = vmatprep.subr.mxu0 0.0
      %1919 = vmatpush1.msra.mxu0 0.0
      %1920 = vmatprep.subr.mxu0 0.0
      %1921 = vmatpush1.msra.mxu0 0.0
      %1922 = vmatprep.subr.mxu0 0.0
      %1923 = vmatpush1.msra.mxu0 0.0
      %1924 = vmatprep.subr.mxu0 0.0
      %1925 = vmatpush1.msra.mxu0 0.0
      %1926 = vmatprep.subr.mxu0 0.0
      %1927 = vmatpush1.msra.mxu0 0.0
      %1928 = vmatprep.subr.mxu0 0.0
      %1929 = vmatpush1.msra.mxu0 0.0
      %1930 = vmatprep.subr.mxu0 0.0
      %1931 = vmatpush1.msra.mxu0 0.0
      %1932 = vmatprep.subr.mxu0 0.0
      %1933 = vmatpush1.msra.mxu0 0.0
      %1934 = vmatprep.subr.mxu0 0.0
      %1935 = vmatpush1.msra.mxu0 0.0
      %1936 = vmatprep.subr.mxu0 0.0
      %1937 = vmatpush1.msra.mxu0 0.0
      %1938 = vmatprep.subr.mxu0 0.0
      %1939 = vmatpush1.msra.mxu0 0.0
      %1940 = vmatprep.subr.mxu0 0.0
      %1941 = vmatpush1.msra.mxu0 0.0
      %1942 = vmatprep.subr.mxu0 0.0
      %1943 = vmatpush1.msra.mxu0 0.0
      %1944 = vmatprep.subr.mxu0 0.0
      %1945 = vmatpush1.msra.mxu0 0.0
      %1946 = vmatprep.subr.mxu0 0.0
      %1947 = vmatpush1.msra.mxu0 0.0
      %1948 = vmatprep.subr.mxu0 0.0
      %1949 = vmatpush1.msra.mxu0 0.0
      %1950 = vmatprep.subr.mxu0 0.0
      %1951 = vmatpush1.msra.mxu0 0.0
      %1952 = vmatprep.subr.mxu0 0.0
      %1953 = vmatpush1.msra.mxu0 0.0
      %1954 = vmatprep.subr.mxu0 0.0
      %1955 = vmatpush1.msra.mxu0 0.0
      %1956 = vmatprep.subr.mxu0 0.0
      %1957 = vmatpush1.msra.mxu0 0.0
      %1958 = vmatprep.subr.mxu0 0.0
      %1959 = vmatpush1.msra.mxu0 0.0
      %1960 = vmatprep.subr.mxu0 0.0
      %1961 = vmatpush1.msra.mxu0 0.0
      %1962 = vmatprep.subr.mxu0 0.0
      %1963 = vmatpush1.msra.mxu0 0.0
      %1964 = vmatprep.subr.mxu0 0.0
      %1965 = vmatpush1.msra.mxu0 0.0
      %1966 = vmatprep.subr.mxu0 0.0
      %1967 = vmatpush1.msra.mxu0 0.0
      %1968 = vmatprep.subr.mxu0 0.0
      %1969 = vmatpush1.msra.mxu0 0.0
      %1970 = vmatprep.subr.mxu0 0.0
      %1971 = vmatpush1.msra.mxu0 0.0
      %1972 = vmatprep.mubr.f32.mxu0 0.0
      %1973 = vmatmul.mubr.f32.gmra.mrb[0].mxu0 %v1890
      %v1974 = vpop.f32.mrb[0].mxu0
      %v1975 = vadd.f32 0.0, %v1974
      %v1976 = vpop.f32.mrb[0].mxu0
      %v1977 = vadd.f32 0.0, %v1976
      %1978 = vdwg.mxu0
      %1979 = vmatprep.subr.mxu0 %v1898
      %1980 = vmatpush1.msra.mxu0 %v1896
      %1981 = vmatprep.subr.mxu0 0.0
      %1982 = vmatpush1.msra.mxu0 0.0
      %1983 = vmatprep.subr.mxu0 0.0
      %1984 = vmatpush1.msra.mxu0 0.0
      %1985 = vmatprep.subr.mxu0 0.0
      %1986 = vmatpush1.msra.mxu0 0.0
      %1987 = vmatprep.subr.mxu0 0.0
      %1988 = vmatpush1.msra.mxu0 0.0
      %1989 = vmatprep.subr.mxu0 0.0
      %1990 = vmatpush1.msra.mxu0 0.0
      %1991 = vmatprep.subr.mxu0 0.0
      %1992 = vmatpush1.msra.mxu0 0.0
      %1993 = vmatprep.subr.mxu0 0.0
      %1994 = vmatpush1.msra.mxu0 0.0
      %1995 = vmatprep.subr.mxu0 0.0
      %1996 = vmatpush1.msra.mxu0 0.0
      %1997 = vmatprep.subr.mxu0 0.0
      %1998 = vmatpush1.msra.mxu0 0.0
      %1999 = vmatprep.subr.mxu0 0.0
      %2000 = vmatpush1.msra.mxu0 0.0
      %2001 = vmatprep.subr.mxu0 0.0
      %2002 = vmatpush1.msra.mxu0 0.0
      %2003 = vmatprep.subr.mxu0 0.0
      %2004 = vmatpush1.msra.mxu0 0.0
      %2005 = vmatprep.subr.mxu0 0.0
      %2006 = vmatpush1.msra.mxu0 0.0
      %2007 = vmatprep.subr.mxu0 0.0
      %2008 = vmatpush1.msra.mxu0 0.0
      %2009 = vmatprep.subr.mxu0 0.0
      %2010 = vmatpush1.msra.mxu0 0.0
      %2011 = vmatprep.subr.mxu0 0.0
      %2012 = vmatpush1.msra.mxu0 0.0
      %2013 = vmatprep.subr.mxu0 0.0
      %2014 = vmatpush1.msra.mxu0 0.0
      %2015 = vmatprep.subr.mxu0 0.0
      %2016 = vmatpush1.msra.mxu0 0.0
      %2017 = vmatprep.subr.mxu0 0.0
      %2018 = vmatpush1.msra.mxu0 0.0
      %2019 = vmatprep.subr.mxu0 0.0
      %2020 = vmatpush1.msra.mxu0 0.0
      %2021 = vmatprep.subr.mxu0 0.0
      %2022 = vmatpush1.msra.mxu0 0.0
      %2023 = vmatprep.subr.mxu0 0.0
      %2024 = vmatpush1.msra.mxu0 0.0
      %2025 = vmatprep.subr.mxu0 0.0
      %2026 = vmatpush1.msra.mxu0 0.0
      %2027 = vmatprep.subr.mxu0 0.0
      %2028 = vmatpush1.msra.mxu0 0.0
      %2029 = vmatprep.subr.mxu0 0.0
      %2030 = vmatpush1.msra.mxu0 0.0
      %2031 = vmatprep.subr.mxu0 0.0
      %2032 = vmatpush1.msra.mxu0 0.0
      %2033 = vmatprep.subr.mxu0 0.0
      %2034 = vmatpush1.msra.mxu0 0.0
      %2035 = vmatprep.subr.mxu0 0.0
      %2036 = vmatpush1.msra.mxu0 0.0
      %2037 = vmatprep.subr.mxu0 0.0
      %2038 = vmatpush1.msra.mxu0 0.0
      %2039 = vmatprep.subr.mxu0 0.0
      %2040 = vmatpush1.msra.mxu0 0.0
      %2041 = vmatprep.subr.mxu0 0.0
      %2042 = vmatpush1.msra.mxu0 0.0
      %2043 = vmatprep.mubr.f32.mxu0 0.0
      %2044 = vmatmul.mubr.f32.gmra.mrb[0].mxu0 %v1890
      %v2045 = vpop.f32.mrb[0].mxu0
      %v2046 = vadd.f32 0.0, %v2045
      %v2047 = vpop.f32.mrb[0].mxu0
      %v2048 = vadd.f32 0.0, %v2047
      %2049 = vdwg.mxu0
      %2050 = vmatprep.subr.mxu0 %v1902
      %2051 = vmatpush1.msra.mxu0 %v1900
      %2052 = vmatprep.subr.mxu0 0.0
      %2053 = vmatpush1.msra.mxu0 0.0
      %2054 = vmatprep.subr.mxu0 0.0
      %2055 = vmatpush1.msra.mxu0 0.0
      %2056 = vmatprep.subr.mxu0 0.0
      %2057 = vmatpush1.msra.mxu0 0.0
      %2058 = vmatprep.subr.mxu0 0.0
      %2059 = vmatpush1.msra.mxu0 0.0
      %2060 = vmatprep.subr.mxu0 0.0
      %2061 = vmatpush1.msra.mxu0 0.0
      %2062 = vmatprep.subr.mxu0 0.0
      %2063 = vmatpush1.msra.mxu0 0.0
      %2064 = vmatprep.subr.mxu0 0.0
      %2065 = vmatpush1.msra.mxu0 0.0
      %2066 = vmatprep.subr.mxu0 0.0
      %2067 = vmatpush1.msra.mxu0 0.0
      %2068 = vmatprep.subr.mxu0 0.0
      %2069 = vmatpush1.msra.mxu0 0.0
      %2070 = vmatprep.subr.mxu0 0.0
      %2071 = vmatpush1.msra.mxu0 0.0
      %2072 = vmatprep.subr.mxu0 0.0
      %2073 = vmatpush1.msra.mxu0 0.0
      %2074 = vmatprep.subr.mxu0 0.0
      %2075 = vmatpush1.msra.mxu0 0.0
      %2076 = vmatprep.subr.mxu0 0.0
      %2077 = vmatpush1.msra.mxu0 0.0
      %2078 = vmatprep.subr.mxu0 0.0
      %2079 = vmatpush1.msra.mxu0 0.0
      %2080 = vmatprep.subr.mxu0 0.0
      %2081 = vmatpush1.msra.mxu0 0.0
      %2082 = vmatprep.subr.mxu0 0.0
      %2083 = vmatpush1.msra.mxu0 0.0
      %2084 = vmatprep.subr.mxu0 0.0
      %2085 = vmatpush1.msra.mxu0 0.0
      %2086 = vmatprep.subr.mxu0 0.0
      %2087 = vmatpush1.msra.mxu0 0.0
      %2088 = vmatprep.subr.mxu0 0.0
      %2089 = vmatpush1.msra.mxu0 0.0
      %2090 = vmatprep.subr.mxu0 0.0
      %2091 = vmatpush1.msra.mxu0 0.0
      %2092 = vmatprep.subr.mxu0 0.0
      %2093 = vmatpush1.msra.mxu0 0.0
      %2094 = vmatprep.subr.mxu0 0.0
      %2095 = vmatpush1.msra.mxu0 0.0
      %2096 = vmatprep.subr.mxu0 0.0
      %2097 = vmatpush1.msra.mxu0 0.0
      %2098 = vmatprep.subr.mxu0 0.0
      %2099 = vmatpush1.msra.mxu0 0.0
      %2100 = vmatprep.subr.mxu0 0.0
      %2101 = vmatpush1.msra.mxu0 0.0
      %2102 = vmatprep.subr.mxu0 0.0
      %2103 = vmatpush1.msra.mxu0 0.0
      %2104 = vmatprep.subr.mxu0 0.0
      %2105 = vmatpush1.msra.mxu0 0.0
      %2106 = vmatprep.subr.mxu0 0.0
      %2107 = vmatpush1.msra.mxu0 0.0
      %2108 = vmatprep.subr.mxu0 0.0
      %2109 = vmatpush1.msra.mxu0 0.0
      %2110 = vmatprep.subr.mxu0 0.0
      %2111 = vmatpush1.msra.mxu0 0.0
      %2112 = vmatprep.subr.mxu0 0.0
      %2113 = vmatpush1.msra.mxu0 0.0
      %2114 = vmatprep.mubr.f32.mxu0 0.0
      %2115 = vmatmul.mubr.f32.gmra.mrb[0].mxu0 %v1890
      %v2116 = vpop.f32.mrb[0].mxu0
      %v2117 = vadd.f32 0.0, %v2116
      %v2118 = vpop.f32.mrb[0].mxu0
      %v2119 = vadd.f32 0.0, %v2118
      %2120 = vdwg.mxu0
      %2121 = vmatprep.subr.mxu0 %v1906
      %2122 = vmatpush1.msra.mxu0 %v1904
      %2123 = vmatprep.subr.mxu0 0.0
      %2124 = vmatpush1.msra.mxu0 0.0
      %2125 = vmatprep.subr.mxu0 0.0
      %2126 = vmatpush1.msra.mxu0 0.0
      %2127 = vmatprep.subr.mxu0 0.0
      %2128 = vmatpush1.msra.mxu0 0.0
      %2129 = vmatprep.subr.mxu0 0.0
      %2130 = vmatpush1.msra.mxu0 0.0
      %2131 = vmatprep.subr.mxu0 0.0
      %2132 = vmatpush1.msra.mxu0 0.0
      %2133 = vmatprep.subr.mxu0 0.0
      %2134 = vmatpush1.msra.mxu0 0.0
      %2135 = vmatprep.subr.mxu0 0.0
      %2136 = vmatpush1.msra.mxu0 0.0
      %2137 = vmatprep.subr.mxu0 0.0
      %2138 = vmatpush1.msra.mxu0 0.0
      %2139 = vmatprep.subr.mxu0 0.0
      %2140 = vmatpush1.msra.mxu0 0.0
      %2141 = vmatprep.subr.mxu0 0.0
      %2142 = vmatpush1.msra.mxu0 0.0
      %2143 = vmatprep.subr.mxu0 0.0
      %2144 = vmatpush1.msra.mxu0 0.0
      %2145 = vmatprep.subr.mxu0 0.0
      %2146 = vmatpush1.msra.mxu0 0.0
      %2147 = vmatprep.subr.mxu0 0.0
      %2148 = vmatpush1.msra.mxu0 0.0
      %2149 = vmatprep.subr.mxu0 0.0
      %2150 = vmatpush1.msra.mxu0 0.0
      %2151 = vmatprep.subr.mxu0 0.0
      %2152 = vmatpush1.msra.mxu0 0.0
      %2153 = vmatprep.subr.mxu0 0.0
      %2154 = vmatpush1.msra.mxu0 0.0
      %2155 = vmatprep.subr.mxu0 0.0
      %2156 = vmatpush1.msra.mxu0 0.0
      %2157 = vmatprep.subr.mxu0 0.0
      %2158 = vmatpush1.msra.mxu0 0.0
      %2159 = vmatprep.subr.mxu0 0.0
      %2160 = vmatpush1.msra.mxu0 0.0
      %2161 = vmatprep.subr.mxu0 0.0
      %2162 = vmatpush1.msra.mxu0 0.0
      %2163 = vmatprep.subr.mxu0 0.0
      %2164 = vmatpush1.msra.mxu0 0.0
      %2165 = vmatprep.subr.mxu0 0.0
      %2166 = vmatpush1.msra.mxu0 0.0
      %2167 = vmatprep.subr.mxu0 0.0
      %2168 = vmatpush1.msra.mxu0 0.0
      %2169 = vmatprep.subr.mxu0 0.0
      %2170 = vmatpush1.msra.mxu0 0.0
      %2171 = vmatprep.subr.mxu0 0.0
      %2172 = vmatpush1.msra.mxu0 0.0
      %2173 = vmatprep.subr.mxu0 0.0
      %2174 = vmatpush1.msra.mxu0 0.0
      %2175 = vmatprep.subr.mxu0 0.0
      %2176 = vmatpush1.msra.mxu0 0.0
      %2177 = vmatprep.subr.mxu0 0.0
      %2178 = vmatpush1.msra.mxu0 0.0
      %2179 = vmatprep.subr.mxu0 0.0
      %2180 = vmatpush1.msra.mxu0 0.0
      %2181 = vmatprep.subr.mxu0 0.0
      %2182 = vmatpush1.msra.mxu0 0.0
      %2183 = vmatprep.subr.mxu0 0.0
      %2184 = vmatpush1.msra.mxu0 0.0
      %2185 = vmatprep.mubr.f32.mxu0 0.0
      %2186 = vmatmul.mubr.f32.gmra.mrb[0].mxu0 %v1890
      %v2187 = vpop.f32.mrb[0].mxu0
      %v2188 = vadd.f32 0.0, %v2187
      %v2189 = vpop.f32.mrb[0].mxu0
      %v2190 = vadd.f32 0.0, %v2189
      %2191 = vdwg.mxu0
      %v2192 = vadd.f32 %v1663, %v1975
      %v2193 = vadd.f32 %v1665, %v1977
      %v2194 = vadd.f32 %v1734, %v2046
      %v2195 = vadd.f32 %v1736, %v2048
      %v2196 = vadd.f32 %v1805, %v2117
      %v2197 = vadd.f32 %v1807, %v2119
      %v2198 = vadd.f32 %v1876, %v2188
      %v2199 = vadd.f32 %v1878, %v2190
      %v2200 = vld [vmem:[%s7] sm:$0x7]
      %v2205 = vcombine.high %v1558, %v1558
      %v2206 = vcombine.high %v1559, %v1559
      %v2207 = vcombine.high %v1560, %v1560
      %v2208 = vcombine.high %v1561, %v1561
      %v2210 = vsel %vm431, %v2200, 0
      %v2212 = vsel %vm456, %v1558, 0
      %v2214 = vsel %vm456, %v2205, 0
      %v2216 = vsel %vm456, %v1559, 0
      %v2218 = vsel %vm456, %v2206, 0
      %v2220 = vsel %vm456, %v1560, 0
      %v2222 = vsel %vm456, %v2207, 0
      %v2224 = vsel %vm456, %v1561, 0
      %v2226 = vsel %vm456, %v2208, 0
      %2228 = vmatprep.subr.mxu0 %v2214
      %2229 = vmatpush1.msra.mxu0 %v2212
      %2230 = vmatprep.subr.mxu0 0.0
      %2231 = vmatpush1.msra.mxu0 0.0
      %2232 = vmatprep.subr.mxu0 0.0
      %2233 = vmatpush1.msra.mxu0 0.0
      %2234 = vmatprep.subr.mxu0 0.0
      %2235 = vmatpush1.msra.mxu0 0.0
      %2236 = vmatprep.subr.mxu0 0.0
      %2237 = vmatpush1.msra.mxu0 0.0
      %2238 = vmatprep.subr.mxu0 0.0
      %2239 = vmatpush1.msra.mxu0 0.0
      %2240 = vmatprep.subr.mxu0 0.0
      %2241 = vmatpush1.msra.mxu0 0.0
      %2242 = vmatprep.subr.mxu0 0.0
      %2243 = vmatpush1.msra.mxu0 0.0
      %2244 = vmatprep.subr.mxu0 0.0
      %2245 = vmatpush1.msra.mxu0 0.0
      %2246 = vmatprep.subr.mxu0 0.0
      %2247 = vmatpush1.msra.mxu0 0.0
      %2248 = vmatprep.subr.mxu0 0.0
      %2249 = vmatpush1.msra.mxu0 0.0
      %2250 = vmatprep.subr.mxu0 0.0
      %2251 = vmatpush1.msra.mxu0 0.0
      %2252 = vmatprep.subr.mxu0 0.0
      %2253 = vmatpush1.msra.mxu0 0.0
      %2254 = vmatprep.subr.mxu0 0.0
      %2255 = vmatpush1.msra.mxu0 0.0
      %2256 = vmatprep.subr.mxu0 0.0
      %2257 = vmatpush1.msra.mxu0 0.0
      %2258 = vmatprep.subr.mxu0 0.0
      %2259 = vmatpush1.msra.mxu0 0.0
      %2260 = vmatprep.subr.mxu0 0.0
      %2261 = vmatpush1.msra.mxu0 0.0
      %2262 = vmatprep.subr.mxu0 0.0
      %2263 = vmatpush1.msra.mxu0 0.0
      %2264 = vmatprep.subr.mxu0 0.0
      %2265 = vmatpush1.msra.mxu0 0.0
      %2266 = vmatprep.subr.mxu0 0.0
      %2267 = vmatpush1.msra.mxu0 0.0
      %2268 = vmatprep.subr.mxu0 0.0
      %2269 = vmatpush1.msra.mxu0 0.0
      %2270 = vmatprep.subr.mxu0 0.0
      %2271 = vmatpush1.msra.mxu0 0.0
      %2272 = vmatprep.subr.mxu0 0.0
      %2273 = vmatpush1.msra.mxu0 0.0
      %2274 = vmatprep.subr.mxu0 0.0
      %2275 = vmatpush1.msra.mxu0 0.0
      %2276 = vmatprep.subr.mxu0 0.0
      %2277 = vmatpush1.msra.mxu0 0.0
      %2278 = vmatprep.subr.mxu0 0.0
      %2279 = vmatpush1.msra.mxu0 0.0
      %2280 = vmatprep.subr.mxu0 0.0
      %2281 = vmatpush1.msra.mxu0 0.0
      %2282 = vmatprep.subr.mxu0 0.0
      %2283 = vmatpush1.msra.mxu0 0.0
      %2284 = vmatprep.subr.mxu0 0.0
      %2285 = vmatpush1.msra.mxu0 0.0
      %2286 = vmatprep.subr.mxu0 0.0
      %2287 = vmatpush1.msra.mxu0 0.0
      %2288 = vmatprep.subr.mxu0 0.0
      %2289 = vmatpush1.msra.mxu0 0.0
      %2290 = vmatprep.subr.mxu0 0.0
      %2291 = vmatpush1.msra.mxu0 0.0
      %2292 = vmatprep.mubr.f32.mxu0 0.0
      %2293 = vmatmul.mubr.f32.gmra.mrb[0].mxu0 %v2210
      %v2294 = vpop.f32.mrb[0].mxu0
      %v2295 = vadd.f32 0.0, %v2294
      %v2296 = vpop.f32.mrb[0].mxu0
      %v2297 = vadd.f32 0.0, %v2296
      %2298 = vdwg.mxu0
      %2299 = vmatprep.subr.mxu0 %v2218
      %2300 = vmatpush1.msra.mxu0 %v2216
      %2301 = vmatprep.subr.mxu0 0.0
      %2302 = vmatpush1.msra.mxu0 0.0
      %2303 = vmatprep.subr.mxu0 0.0
      %2304 = vmatpush1.msra.mxu0 0.0
      %2305 = vmatprep.subr.mxu0 0.0
      %2306 = vmatpush1.msra.mxu0 0.0
      %2307 = vmatprep.subr.mxu0 0.0
      %2308 = vmatpush1.msra.mxu0 0.0
      %2309 = vmatprep.subr.mxu0 0.0
      %2310 = vmatpush1.msra.mxu0 0.0
      %2311 = vmatprep.subr.mxu0 0.0
      %2312 = vmatpush1.msra.mxu0 0.0
      %2313 = vmatprep.subr.mxu0 0.0
      %2314 = vmatpush1.msra.mxu0 0.0
      %2315 = vmatprep.subr.mxu0 0.0
      %2316 = vmatpush1.msra.mxu0 0.0
      %2317 = vmatprep.subr.mxu0 0.0
      %2318 = vmatpush1.msra.mxu0 0.0
      %2319 = vmatprep.subr.mxu0 0.0
      %2320 = vmatpush1.msra.mxu0 0.0
      %2321 = vmatprep.subr.mxu0 0.0
      %2322 = vmatpush1.msra.mxu0 0.0
      %2323 = vmatprep.subr.mxu0 0.0
      %2324 = vmatpush1.msra.mxu0 0.0
      %2325 = vmatprep.subr.mxu0 0.0
      %2326 = vmatpush1.msra.mxu0 0.0
      %2327 = vmatprep.subr.mxu0 0.0
      %2328 = vmatpush1.msra.mxu0 0.0
      %2329 = vmatprep.subr.mxu0 0.0
      %2330 = vmatpush1.msra.mxu0 0.0
      %2331 = vmatprep.subr.mxu0 0.0
      %2332 = vmatpush1.msra.mxu0 0.0
      %2333 = vmatprep.subr.mxu0 0.0
      %2334 = vmatpush1.msra.mxu0 0.0
      %2335 = vmatprep.subr.mxu0 0.0
      %2336 = vmatpush1.msra.mxu0 0.0
      %2337 = vmatprep.subr.mxu0 0.0
      %2338 = vmatpush1.msra.mxu0 0.0
      %2339 = vmatprep.subr.mxu0 0.0
      %2340 = vmatpush1.msra.mxu0 0.0
      %2341 = vmatprep.subr.mxu0 0.0
      %2342 = vmatpush1.msra.mxu0 0.0
      %2343 = vmatprep.subr.mxu0 0.0
      %2344 = vmatpush1.msra.mxu0 0.0
      %2345 = vmatprep.subr.mxu0 0.0
      %2346 = vmatpush1.msra.mxu0 0.0
      %2347 = vmatprep.subr.mxu0 0.0
      %2348 = vmatpush1.msra.mxu0 0.0
      %2349 = vmatprep.subr.mxu0 0.0
      %2350 = vmatpush1.msra.mxu0 0.0
      %2351 = vmatprep.subr.mxu0 0.0
      %2352 = vmatpush1.msra.mxu0 0.0
      %2353 = vmatprep.subr.mxu0 0.0
      %2354 = vmatpush1.msra.mxu0 0.0
      %2355 = vmatprep.subr.mxu0 0.0
      %2356 = vmatpush1.msra.mxu0 0.0
      %2357 = vmatprep.subr.mxu0 0.0
      %2358 = vmatpush1.msra.mxu0 0.0
      %2359 = vmatprep.subr.mxu0 0.0
      %2360 = vmatpush1.msra.mxu0 0.0
      %2361 = vmatprep.subr.mxu0 0.0
      %2362 = vmatpush1.msra.mxu0 0.0
      %2363 = vmatprep.mubr.f32.mxu0 0.0
      %2364 = vmatmul.mubr.f32.gmra.mrb[0].mxu0 %v2210
      %v2365 = vpop.f32.mrb[0].mxu0
      %v2366 = vadd.f32 0.0, %v2365
      %v2367 = vpop.f32.mrb[0].mxu0
      %v2368 = vadd.f32 0.0, %v2367
      %2369 = vdwg.mxu0
      %2370 = vmatprep.subr.mxu0 %v2222
      %2371 = vmatpush1.msra.mxu0 %v2220
      %2372 = vmatprep.subr.mxu0 0.0
      %2373 = vmatpush1.msra.mxu0 0.0
      %2374 = vmatprep.subr.mxu0 0.0
      %2375 = vmatpush1.msra.mxu0 0.0
      %2376 = vmatprep.subr.mxu0 0.0
      %2377 = vmatpush1.msra.mxu0 0.0
      %2378 = vmatprep.subr.mxu0 0.0
      %2379 = vmatpush1.msra.mxu0 0.0
      %2380 = vmatprep.subr.mxu0 0.0
      %2381 = vmatpush1.msra.mxu0 0.0
      %2382 = vmatprep.subr.mxu0 0.0
      %2383 = vmatpush1.msra.mxu0 0.0
      %2384 = vmatprep.subr.mxu0 0.0
      %2385 = vmatpush1.msra.mxu0 0.0
      %2386 = vmatprep.subr.mxu0 0.0
      %2387 = vmatpush1.msra.mxu0 0.0
      %2388 = vmatprep.subr.mxu0 0.0
      %2389 = vmatpush1.msra.mxu0 0.0
      %2390 = vmatprep.subr.mxu0 0.0
      %2391 = vmatpush1.msra.mxu0 0.0
      %2392 = vmatprep.subr.mxu0 0.0
      %2393 = vmatpush1.msra.mxu0 0.0
      %2394 = vmatprep.subr.mxu0 0.0
      %2395 = vmatpush1.msra.mxu0 0.0
      %2396 = vmatprep.subr.mxu0 0.0
      %2397 = vmatpush1.msra.mxu0 0.0
      %2398 = vmatprep.subr.mxu0 0.0
      %2399 = vmatpush1.msra.mxu0 0.0
      %2400 = vmatprep.subr.mxu0 0.0
      %2401 = vmatpush1.msra.mxu0 0.0
      %2402 = vmatprep.subr.mxu0 0.0
      %2403 = vmatpush1.msra.mxu0 0.0
      %2404 = vmatprep.subr.mxu0 0.0
      %2405 = vmatpush1.msra.mxu0 0.0
      %2406 = vmatprep.subr.mxu0 0.0
      %2407 = vmatpush1.msra.mxu0 0.0
      %2408 = vmatprep.subr.mxu0 0.0
      %2409 = vmatpush1.msra.mxu0 0.0
      %2410 = vmatprep.subr.mxu0 0.0
      %2411 = vmatpush1.msra.mxu0 0.0
      %2412 = vmatprep.subr.mxu0 0.0
      %2413 = vmatpush1.msra.mxu0 0.0
      %2414 = vmatprep.subr.mxu0 0.0
      %2415 = vmatpush1.msra.mxu0 0.0
      %2416 = vmatprep.subr.mxu0 0.0
      %2417 = vmatpush1.msra.mxu0 0.0
      %2418 = vmatprep.subr.mxu0 0.0
      %2419 = vmatpush1.msra.mxu0 0.0
      %2420 = vmatprep.subr.mxu0 0.0
      %2421 = vmatpush1.msra.mxu0 0.0
      %2422 = vmatprep.subr.mxu0 0.0
      %2423 = vmatpush1.msra.mxu0 0.0
      %2424 = vmatprep.subr.mxu0 0.0
      %2425 = vmatpush1.msra.mxu0 0.0
      %2426 = vmatprep.subr.mxu0 0.0
      %2427 = vmatpush1.msra.mxu0 0.0
      %2428 = vmatprep.subr.mxu0 0.0
      %2429 = vmatpush1.msra.mxu0 0.0
      %2430 = vmatprep.subr.mxu0 0.0
      %2431 = vmatpush1.msra.mxu0 0.0
      %2432 = vmatprep.subr.mxu0 0.0
      %2433 = vmatpush1.msra.mxu0 0.0
      %2434 = vmatprep.mubr.f32.mxu0 0.0
      %2435 = vmatmul.mubr.f32.gmra.mrb[0].mxu0 %v2210
      %v2436 = vpop.f32.mrb[0].mxu0
      %v2437 = vadd.f32 0.0, %v2436
      %v2438 = vpop.f32.mrb[0].mxu0
      %v2439 = vadd.f32 0.0, %v2438
      %2440 = vdwg.mxu0
      %2441 = vmatprep.subr.mxu0 %v2226
      %2442 = vmatpush1.msra.mxu0 %v2224
      %2443 = vmatprep.subr.mxu0 0.0
      %2444 = vmatpush1.msra.mxu0 0.0
      %2445 = vmatprep.subr.mxu0 0.0
      %2446 = vmatpush1.msra.mxu0 0.0
      %2447 = vmatprep.subr.mxu0 0.0
      %2448 = vmatpush1.msra.mxu0 0.0
      %2449 = vmatprep.subr.mxu0 0.0
      %2450 = vmatpush1.msra.mxu0 0.0
      %2451 = vmatprep.subr.mxu0 0.0
      %2452 = vmatpush1.msra.mxu0 0.0
      %2453 = vmatprep.subr.mxu0 0.0
      %2454 = vmatpush1.msra.mxu0 0.0
      %2455 = vmatprep.subr.mxu0 0.0
      %2456 = vmatpush1.msra.mxu0 0.0
      %2457 = vmatprep.subr.mxu0 0.0
      %2458 = vmatpush1.msra.mxu0 0.0
      %2459 = vmatprep.subr.mxu0 0.0
      %2460 = vmatpush1.msra.mxu0 0.0
      %2461 = vmatprep.subr.mxu0 0.0
      %2462 = vmatpush1.msra.mxu0 0.0
      %2463 = vmatprep.subr.mxu0 0.0
      %2464 = vmatpush1.msra.mxu0 0.0
      %2465 = vmatprep.subr.mxu0 0.0
      %2466 = vmatpush1.msra.mxu0 0.0
      %2467 = vmatprep.subr.mxu0 0.0
      %2468 = vmatpush1.msra.mxu0 0.0
      %2469 = vmatprep.subr.mxu0 0.0
      %2470 = vmatpush1.msra.mxu0 0.0
      %2471 = vmatprep.subr.mxu0 0.0
      %2472 = vmatpush1.msra.mxu0 0.0
      %2473 = vmatprep.subr.mxu0 0.0
      %2474 = vmatpush1.msra.mxu0 0.0
      %2475 = vmatprep.subr.mxu0 0.0
      %2476 = vmatpush1.msra.mxu0 0.0
      %2477 = vmatprep.subr.mxu0 0.0
      %2478 = vmatpush1.msra.mxu0 0.0
      %2479 = vmatprep.subr.mxu0 0.0
      %2480 = vmatpush1.msra.mxu0 0.0
      %2481 = vmatprep.subr.mxu0 0.0
      %2482 = vmatpush1.msra.mxu0 0.0
      %2483 = vmatprep.subr.mxu0 0.0
      %2484 = vmatpush1.msra.mxu0 0.0
      %2485 = vmatprep.subr.mxu0 0.0
      %2486 = vmatpush1.msra.mxu0 0.0
      %2487 = vmatprep.subr.mxu0 0.0
      %2488 = vmatpush1.msra.mxu0 0.0
      %2489 = vmatprep.subr.mxu0 0.0
      %2490 = vmatpush1.msra.mxu0 0.0
      %2491 = vmatprep.subr.mxu0 0.0
      %2492 = vmatpush1.msra.mxu0 0.0
      %2493 = vmatprep.subr.mxu0 0.0
      %2494 = vmatpush1.msra.mxu0 0.0
      %2495 = vmatprep.subr.mxu0 0.0
      %2496 = vmatpush1.msra.mxu0 0.0
      %2497 = vmatprep.subr.mxu0 0.0
      %2498 = vmatpush1.msra.mxu0 0.0
      %2499 = vmatprep.subr.mxu0 0.0
      %2500 = vmatpush1.msra.mxu0 0.0
      %2501 = vmatprep.subr.mxu0 0.0
      %2502 = vmatpush1.msra.mxu0 0.0
      %2503 = vmatprep.subr.mxu0 0.0
      %2504 = vmatpush1.msra.mxu0 0.0
      %2505 = vmatprep.mubr.f32.mxu0 0.0
      %2506 = vmatmul.mubr.f32.gmra.mrb[0].mxu0 %v2210
      %v2507 = vpop.f32.mrb[0].mxu0
      %v2508 = vadd.f32 0.0, %v2507
      %v2509 = vpop.f32.mrb[0].mxu0
      %v2510 = vadd.f32 0.0, %v2509
      %2511 = vdwg.mxu0
      %v2512 = vadd.f32 %v2192, %v2295
      %v2513 = vadd.f32 %v2193, %v2297
      %v2514 = vadd.f32 %v2194, %v2366
      %v2515 = vadd.f32 %v2195, %v2368
      %v2516 = vadd.f32 %v2196, %v2437
      %v2517 = vadd.f32 %v2197, %v2439
      %v2518 = vadd.f32 %v2198, %v2508
      %v2519 = vadd.f32 %v2199, %v2510
      %v2528 = vcombine.low %v2512, %v2513
      %v2529 = vcombine.low %v2514, %v2515
      %v2530 = vcombine.low %v2516, %v2517
      %v2531 = vcombine.low %v2518, %v2519
      %2536 = vst [vmem:[%s361] sm:$0x77] %v2528
      %2537 = vst [vmem:[%s361 + $0x8] sm:$0x77] %v2529
      %2538 = vst [vmem:[%s361 + $0x10] sm:$0x77] %v2530
      %2539 = vst [vmem:[%s361 + $0x18] sm:$0x77] %v2531
      %s2540 = smul.u32 8, %s21
      %p2541 = scmp.lt.s32.totalorder %s2540, 15
      %s2542 = scalar_select %p2541, %s2540, 15
      %s2543 = smul.addr %s2542, 4
      %s2544 = scalar_lea.vmem %s10, %s2543
      // Predicated region
      $region61: #{_forward.1} parent=59 // pred_check
        %p2545 = pneg %p254
      $region62: #{_forward.1} parent=59 // pred_check_branch
        %2547 = sbr.rel (%p2545) target = $region64
      $region63: #{_forward.1} parent=59 // pred_region
        %s2548 = smul.u32 8, %s21
      $region64: #{_forward.1} parent=59 // pred_fallthru
        _
    $region60: #{_forward.1} parent=5 // pred_fallthru
      _
    %p2549 = scmp.le.s32.totalorder 2, %s16
    // Predicated region
    $region65: #{_forward.1} parent=5 // pred_check
      %p2550 = pneg %p2549
    $region66: #{_forward.1} parent=5 // pred_check_branch
      %2552 = sbr.rel (%p2550) target = $region68
    $region67: #{_forward.1} parent=5 // pred_region
      %s2553 = ssub.s32 %s16, 2
      // Predicated region
      $region69: #{_forward.1} parent=67 // pred_check
        %p2554 = pneg %p260
      $region70: #{_forward.1} parent=67 // pred_check_branch
        %2556 = sbr.rel (%p2554) target = $region72
      $region71: #{_forward.1} parent=67 // pred_region
        %s2557 = smul.u32 8, %s22
        %p2558 = scmp.lt.s32.totalorder %s2557, 15
        %s2559 = scalar_select %p2558, %s2557, 15
        %s2560 = smul.addr %s2559, 4
        %s2561 = scalar_lea.vmem %s10, %s2560
      $region72: #{_forward.1} parent=67 // pred_fallthru
        _
    $region68: #{_forward.1} parent=5 // pred_fallthru
      _
  $region6: #{_forward.1} parent=0 // loop_footer
    %s20 = sadd.s32 1, %s16
  $region7: #{_forward.1} parent=0 // loop_footer_branch
    %15 = sbr.rel target = $region3
  $region8: #{_forward.1} parent=0 // loop_exit
    _

</llo_original>
